<compile_context>
chip_gen: v7x
topology: tpu7x:2x2x1
jax: 0.10.0
libtpu: 0.0.40
codegen_flags: <defaults>
</compile_context>

<pallas_src>
import functools
import math

import jax
import jax.numpy as jnp
from jax.experimental import pallas as pl
from jax.experimental.pallas import tpu as pltpu

_BN_EPS = 1e-5
_LT_TARGET = 4096                     # flat rows per grid step (cap OK for v7x 64MiB VMEM)
_VMEM_LIMIT = 48 * 1024 * 1024


def _ceil_to(v, m):
    return ((v + m - 1) // m) * m


def _cdiv(a, b):
    return -(-a // b)


# --------------------------------------------------------------------------- #
# Pallas kernel: multi-input conv as accumulated tap matmuls + BN + ReLU + res
# --------------------------------------------------------------------------- #
def _conv_kernel(*refs, cps, taps_rel, ntaps, lt, hb, W, H, has_xc, relu, has_res):
    # refs: [xcoord?] + per input (cur[, pre, post]) + [res?] + w, scale, bias | out
    idx = 0
    xc_ref = None
    if has_xc:
        xc_ref = refs[idx]; idx += 1
    ins = []
    for _ in cps:
        if hb > 0:
            ins.append((refs[idx], refs[idx + 1], refs[idx + 2])); idx += 3
        else:
            ins.append((refs[idx], None, None)); idx += 1
    res_ref = None
    if has_res:
        res_ref = refs[idx]; idx += 1
    w_ref, s_ref, b_ref, o_ref = refs[idx], refs[idx + 1], refs[idx + 2], refs[idx + 3]

    need_row = any(dy != 0 for _, dy, _ in taps_rel)
    if need_row:
        row = (pl.program_id(1) * lt
               + jax.lax.broadcasted_iota(jnp.int32, (lt, 1), 0))   # global flat idx
    if has_xc:
        xv = xc_ref[0]                                              # (lt,1) x coord

    acc = None
    wbase = 0
    for k, cp in enumerate(cps):
        cur_ref, pre_ref, post_ref = ins[k]
        cur = cur_ref[0]
        if hb > 0:
            ext = jnp.concatenate([pre_ref[0], cur, post_ref[0]], axis=0)
        else:
            ext = cur
        for (t, dy, dx) in taps_rel:
            a = hb + dy * W + dx
            tap = ext[a:a + lt, :]
            conds = []
            if dy < 0:
                conds.append(row >= (-dy) * W)
            elif dy > 0:
                conds.append(row < (H - dy) * W)
            if dx < 0:
                conds.append(xv >= -dx)
            elif dx > 0:
                conds.append(xv < (W - dx))
            if conds:
                m = conds[0]
                for c in conds[1:]:
                    m = jnp.logical_and(m, c)
                tap = jnp.where(m, tap, jnp.zeros_like(tap))
            part = jnp.dot(tap, w_ref[wbase + t * cp: wbase + (t + 1) * cp, :],
                           preferred_element_type=jnp.float32)
            acc = part if acc is None else acc + part
        wbase += ntaps * cp

    y = acc * s_ref[...] + b_ref[...]          # folded BN (f32 epilogue)
    if relu:
        y = jnp.maximum(y, 0.0)
    if has_res:                                 # residual added AFTER relu (PyTorch order)
        y = y + res_ref[0].astype(jnp.float32)
    o_ref[0] = y.astype(o_ref.dtype)


@functools.partial(jax.jit,
                   static_argnames=("ksize", "dilation", "relu", "cout", "out_dtype"))
def _conv2d_pallas(xs, w, scale, bias, residual, *, ksize, dilation, relu, cout,
                   out_dtype):
    """xs: tuple of NHWC activations (same N,H,W).  w: packed (sum_k taps*Cp_k, Coutp)."""
    N, H, W, _ = xs[0].shape
    d = dilation
    coutp = w.shape[1]
    ntaps = ksize * ksize

    # Statically drop taps that can never be in-bounds (deep stages: d >= H or W).
    if ksize == 3:
        taps_rel = tuple(
            ((dy + 1) * 3 + (dx + 1), dy * d, dx * d)
            for dy in (-1, 0, 1) for dx in (-1, 0, 1)
            if not ((dy != 0 and d >= H) or (dx != 0 and d >= W)))
    else:
        taps_rel = ((0, 0, 0),)

    max_off = max(abs(dy * W + dx) for _, dy, dx in taps_rel)
    hb = _ceil_to(max_off, 8) if max_off > 0 else 0
    has_xc = any(dx != 0 for _, _, dx in taps_rel)

    L = H * W
    n_t = max(1, _cdiv(L, _LT_TARGET))
    if N * n_t < 2 and L >= 2 * max(hb, 8):
        n_t = 2                                  # keep both v7x TensorCores busy
    lt = _ceil_to(_cdiv(L, n_t), 8)
    if hb > 0:
        lt = _ceil_to(max(lt, hb), hb)           # lt multiple of hb -> exact halo index
    lt = max(lt, 8)
    n_t = max(1, _cdiv(L, lt))
    m = (lt // hb) if hb > 0 else 0
    n_hb = _cdiv(L, hb) if hb > 0 else 0

    in_specs, args = [], []
    if has_xc:
        xc = (jax.lax.iota(jnp.int32, L) % W).reshape(1, L, 1)
        in_specs.append(pl.BlockSpec((1, lt, 1), lambda n, i: (0, i, 0)))
        args.append(xc)

    cps = []
    for xk in xs:
        C = xk.shape[-1]
        Cp = _ceil_to(max(C, 8), 8)
        xk = xk.astype(jnp.bfloat16)
        if Cp > C:
            xk = jnp.pad(xk, ((0, 0), (0, 0), (0, 0), (0, Cp - C)))
        xf = xk.reshape(N, L, Cp)
        cps.append(Cp)
        in_specs.append(pl.BlockSpec((1, lt, Cp), lambda n, i: (n, i, 0)))
        args.append(xf)
        if hb > 0:
            # halo-only fetches (hb rows), not a full extra tile
            in_specs.append(pl.BlockSpec(
                (1, hb, Cp), lambda n, i, _m=m: (n, jnp.maximum(i * _m - 1, 0), 0)))
            args.append(xf)
            in_specs.append(pl.BlockSpec(
                (1, hb, Cp),
                lambda n, i, _m=m, _nb=n_hb: (n, jnp.minimum((i + 1) * _m, _nb - 1), 0)))
            args.append(xf)
    assert w.shape[0] == ntaps * sum(cps)

    has_res = residual is not None
    if has_res:
        assert residual.shape[-1] == coutp
        r = residual.astype(jnp.bfloat16).reshape(N, L, coutp)
        in_specs.append(pl.BlockSpec((1, lt, coutp), lambda n, i: (n, i, 0)))
        args.append(r)

    in_specs += [pl.BlockSpec((w.shape[0], coutp), lambda n, i: (0, 0)),
                 pl.BlockSpec((1, coutp), lambda n, i: (0, 0)),
                 pl.BlockSpec((1, coutp), lambda n, i: (0, 0))]
    args += [w, scale, bias]

    kern = functools.partial(_conv_kernel, cps=tuple(cps), taps_rel=taps_rel,
                             ntaps=ntaps, lt=lt, hb=hb, W=W, H=H,
                             has_xc=has_xc, relu=relu, has_res=has_res)

    out = pl.pallas_call(
        kern,
        out_shape=jax.ShapeDtypeStruct((N, L, coutp), out_dtype),
        grid_spec=pltpu.PrefetchScalarGridSpec(
            num_scalar_prefetch=0,
            grid=(N, n_t),
            in_specs=in_specs,
            out_specs=pl.BlockSpec((1, lt, coutp), lambda n, i: (n, i, 0)),
        ),
        compiler_params=pltpu.CompilerParams(
            dimension_semantics=("parallel", "parallel"),
            vmem_limit_bytes=_VMEM_LIMIT,
        ),
    )(*args)

    out = out.reshape(N, H, W, coutp)
    if cout != coutp:
        out = out[..., :cout]
    return out


def conv_op(xs, p, dilation=1, relu=False, residual=None, out_dtype=jnp.bfloat16):
    if not isinstance(xs, (list, tuple)):
        xs = (xs,)
    return _conv2d_pallas(tuple(xs), p["w"], p["scale"], p["bias"], residual,
                          ksize=p["ksize"], dilation=dilation, relu=relu,
                          cout=p["cout"], out_dtype=out_dtype)


def rebn(xs, p, dirate=1, residual=None):
    # REBNCONV: conv3x3(pad=dirate, dilation=dirate) -> BN(eval, folded) -> ReLU
    return conv_op(xs, p, dilation=dirate, relu=True, residual=residual)


# --------------------------------------------------------------------------- #
# Pooling / upsampling glue (kept in XLA)
# --------------------------------------------------------------------------- #
def maxpool2(x):
    # nn.MaxPool2d(2, stride=2, ceil_mode=True) on NHWC.
    N, H, W, C = x.shape
    Ho, Wo = -(-H // 2), -(-W // 2)
    neg = jnp.finfo(x.dtype).min
    xp = jnp.pad(x, ((0, 0), (0, Ho * 2 - H), (0, Wo * 2 - W), (0, 0)),
                 constant_values=neg)
    return xp.reshape(N, Ho, 2, Wo, 2, C).max(axis=(2, 4))


def upsample_like(src, tar):
    # F.upsample(mode='bilinear') ~ jax.image.resize bilinear (not bit-exact).
    N, _, _, C = src.shape
    return jax.image.resize(src, (N, tar.shape[1], tar.shape[2], C),
                            method="bilinear")


# --------------------------------------------------------------------------- #
# Deterministic parameter construction (synthetic init, no checkpoint load)
# --------------------------------------------------------------------------- #
class _Keys:
    def __init__(self, seed=0):
        self._key = jax.random.PRNGKey(seed)

    def next(self):
        self._key, k = jax.random.split(self._key)
        return k


def _init_conv(ks, ksize, cins, cout, zero=False, with_bn=False):
    """cins: tuple of per-input channel counts (fused-concat conv support)."""
    taps = ksize * ksize
    coutp = _ceil_to(max(cout, 8), 8)
    fan_in = taps * sum(cins)
    blocks = []
    for cin in cins:
        cinp = _ceil_to(max(cin, 8), 8)
        if zero:  # zero_module(conv_nd(...)) -> weight zeroed
            wk = jnp.zeros((taps, cin, cout), jnp.float32)
        else:
            wk = jax.random.normal(ks.next(), (taps, cin, cout), jnp.float32) \
                * math.sqrt(2.0 / fan_in)
        wp = jnp.zeros((taps, cinp, coutp), jnp.float32).at[:, :cin, :cout].set(wk)
        blocks.append(wp.reshape(taps * cinp, coutp))
    w_packed = jnp.concatenate(blocks, axis=0).astype(jnp.bfloat16)

    if zero:
        b = jnp.zeros((cout,), jnp.float32)
    else:
        b = jax.random.normal(ks.next(), (cout,), jnp.float32) * 0.01
    if with_bn:  # fresh BatchNorm2d in eval: gamma=1, beta=0, mean=0, var=1
        s = jnp.full((cout,), 1.0 / math.sqrt(1.0 + _BN_EPS), jnp.float32)
        bf = b * s
    else:
        s = jnp.ones((cout,), jnp.float32)
        bf = b
    sp = jnp.zeros((coutp,), jnp.float32).at[:cout].set(s).reshape(1, coutp)
    bp = jnp.zeros((coutp,), jnp.float32).at[:cout].set(bf).reshape(1, coutp)
    return {"w": w_packed, "scale": sp, "bias": bp, "ksize": ksize, "cout": cout}


def _rebn_params(ks, cins, cout):
    return _init_conv(ks, 3, cins, cout, with_bn=True)


def _rsu_params(ks, depth, in_chs, mid, out):
    p = {"in": _rebn_params(ks, in_chs, out), "c1": _rebn_params(ks, (out,), mid)}
    for i in range(2, depth + 1):
        p[f"c{i}"] = _rebn_params(ks, (mid,), mid)
    for i in range(depth - 1, 1, -1):
        p[f"c{i}d"] = _rebn_params(ks, (mid, mid), mid)
    p["c1d"] = _rebn_params(ks, (mid, mid), out)
    return p


def _rsu4f_params(ks, in_chs, mid, out):
    return {
        "in": _rebn_params(ks, in_chs, out),
        "c1": _rebn_params(ks, (out,), mid),
        "c2": _rebn_params(ks, (mid,), mid),
        "c3": _rebn_params(ks, (mid,), mid),
        "c4": _rebn_params(ks, (mid,), mid),
        "c3d": _rebn_params(ks, (mid, mid), mid),
        "c2d": _rebn_params(ks, (mid, mid), mid),
        "c1d": _rebn_params(ks, (mid, mid), out),
    }


def init_params(seed=0, in_ch=3, out_ch=1):
    ks = _Keys(seed)
    P = {}
    P["zero_conv0"] = _init_conv(ks, 1, (in_ch,), in_ch, zero=True)
    P["stage1"] = _rsu_params(ks, 7, (in_ch,), 16, 64)
    P["zero_conv1"] = _init_conv(ks, 1, (64,), 64, zero=True)
    P["stage2"] = _rsu_params(ks, 6, (64,), 16, 64)
    P["zero_conv2"] = _init_conv(ks, 1, (64,), 64, zero=True)
    P["stage3"] = _rsu_params(ks, 5, (64,), 16, 64)
    P["zero_conv3"] = _init_conv(ks, 1, (64,), 64, zero=True)
    P["stage4"] = _rsu_params(ks, 4, (64,), 16, 64)
    P["zero_conv4"] = _init_conv(ks, 1, (64,), 64, zero=True)
    P["stage5"] = _rsu4f_params(ks, (64,), 16, 64)
    P["zero_conv5"] = _init_conv(ks, 1, (64,), 64, zero=True)
    P["stage6"] = _rsu4f_params(ks, (64,), 16, 64)
    P["zero_conv6"] = _init_conv(ks, 1, (64,), 64, zero=True)
    P["stage5d"] = _rsu4f_params(ks, (64, 64), 16, 64)
    P["stage4d"] = _rsu_params(ks, 4, (64, 64), 16, 64)
    P["stage3d"] = _rsu_params(ks, 5, (64, 64), 16, 64)
    P["stage2d"] = _rsu_params(ks, 6, (64, 64), 16, 64)
    P["stage1d"] = _rsu_params(ks, 7, (64, 64), 16, 64)
    for i in range(1, 7):
        P[f"side{i}"] = _init_conv(ks, 3, (64,), out_ch)      # Conv2d(64, out, 3, pad=1)
    P["outconv"] = _init_conv(ks, 1, (6 * out_ch,), out_ch)    # Conv2d(6*out, out, 1)
    return P


# --------------------------------------------------------------------------- #
# RSU blocks (standard U2Net) built on the fused Pallas conv primitive
# --------------------------------------------------------------------------- #
def _rsu_forward(x, p, depth):
    hxin = rebn(x, p["in"])
    enc = [rebn(hxin, p["c1"])]                            # hx1
    for i in range(2, depth):
        enc.append(rebn(maxpool2(enc[-1]), p[f"c{i}"]))
    hxd = rebn(enc[-1], p[f"c{depth}"], dirate=2)          # deepest, dilated conv
    for i in range(depth - 1, 1, -1):
        hxd = rebn((hxd, enc[i - 1]), p[f"c{i}d"])         # fused concat
        hxd = upsample_like(hxd, enc[i - 2])
    return rebn((hxd, enc[0]), p["c1d"], residual=hxin)    # fused concat + residual


def _rsu4f_forward(x, p):
    hxin = rebn(x, p["in"])
    hx1 = rebn(hxin, p["c1"], 1)
    hx2 = rebn(hx1, p["c2"], 2)
    hx3 = rebn(hx2, p["c3"], 4)
    hx4 = rebn(hx3, p["c4"], 8)
    hx3d = rebn((hx4, hx3), p["c3d"], 4)
    hx2d = rebn((hx3d, hx2), p["c2d"], 2)
    return rebn((hx2d, hx1), p["c1d"], 1, residual=hxin)


# --------------------------------------------------------------------------- #
# ControlU2Netpseg2 forward
# --------------------------------------------------------------------------- #
def controlu2net_forward(P, x_nchw, seg_nchw):
    x = jnp.transpose(x_nchw, (0, 2, 3, 1)).astype(jnp.bfloat16)
    seg = jnp.transpose(seg_nchw, (0, 2, 3, 1)).astype(jnp.bfloat16)

    # ---- control branch (zero-conv gated) ----
    hint = conv_op(seg, P["zero_conv0"])
    outs = []
    chx1 = _rsu_forward(hint, P["stage1"], 7)
    outs.append(conv_op(chx1, P["zero_conv1"]))
    chx2 = _rsu_forward(maxpool2(chx1), P["stage2"], 6)
    outs.append(conv_op(chx2, P["zero_conv2"]))
    chx3 = _rsu_forward(maxpool2(chx2), P["stage3"], 5)
    outs.append(conv_op(chx3, P["zero_conv3"]))
    chx4 = _rsu_forward(maxpool2(chx3), P["stage4"], 4)
    outs.append(conv_op(chx4, P["zero_conv4"]))
    chx5 = _rsu4f_forward(maxpool2(chx4), P["stage5"])
    outs.append(conv_op(chx5, P["zero_conv5"]))
    chx6 = _rsu4f_forward(maxpool2(chx5), P["stage6"])
    outs.append(conv_op(chx6, P["zero_conv6"]))

    # ---- frozen encoder branch (torch.no_grad() == plain inference here) ----
    hx1 = _rsu_forward(x, P["stage1"], 7)
    hx2 = _rsu_forward(maxpool2(hx1), P["stage2"], 6)
    hx3 = _rsu_forward(maxpool2(hx2), P["stage3"], 5)
    hx4 = _rsu_forward(maxpool2(hx3), P["stage4"], 4)
    hx5 = _rsu4f_forward(maxpool2(hx4), P["stage5"])
    hx6 = _rsu4f_forward(maxpool2(hx5), P["stage6"])

    # ---- decoder with injected control features (concats fused into stage convs) ----
    hx6 = hx6 + outs.pop()
    hx6up = upsample_like(hx6, hx5)
    hx5d = _rsu4f_forward((hx6up, hx5 + outs.pop()), P["stage5d"])
    hx5dup = upsample_like(hx5d, hx4)
    hx4d = _rsu_forward((hx5dup, hx4 + outs.pop()), P["stage4d"], 4)
    hx4dup = upsample_like(hx4d, hx3)
    hx3d = _rsu_forward((hx4dup, hx3 + outs.pop()), P["stage3d"], 5)
    hx3dup = upsample_like(hx3d, hx2)
    hx2d = _rsu_forward((hx3dup, hx2 + outs.pop()), P["stage2d"], 6)
    hx2dup = upsample_like(hx2d, hx1)
    hx1d = _rsu_forward((hx2dup, hx1 + outs.pop()), P["stage1d"], 7)

    # ---- side outputs (f32 logits) ----
    d1 = conv_op(hx1d, P["side1"], out_dtype=jnp.float32)
    d2 = upsample_like(conv_op(hx2d, P["side2"], out_dtype=jnp.float32), d1)
    d3 = upsample_like(conv_op(hx3d, P["side3"], out_dtype=jnp.float32), d1)
    d4 = upsample_like(conv_op(hx4d, P["side4"], out_dtype=jnp.float32), d1)
    d5 = upsample_like(conv_op(hx5d, P["side5"], out_dtype=jnp.float32), d1)
    d6 = upsample_like(conv_op(hx6, P["side6"], out_dtype=jnp.float32), d1)
    d0 = conv_op(jnp.concatenate([d1, d2, d3, d4, d5, d6], -1), P["outconv"],
                 out_dtype=jnp.float32)

    def _out(t):
        return jnp.transpose(jax.nn.sigmoid(t.astype(jnp.float32)), (0, 3, 1, 2))

    return tuple(_out(d) for d in (d0, d1, d2, d3, d4, d5, d6))


# --------------------------------------------------------------------------- #
if __name__ == "__main__":
    key = jax.random.PRNGKey(0)
    kx, ksg = jax.random.split(key)
    N, C, H, W = 2, 3, 32, 32
    x = jax.random.normal(kx, (N, C, H, W), jnp.float32)
    seg = jax.random.normal(ksg, (N, C, H, W), jnp.float32)

    params = init_params(seed=0, in_ch=3, out_ch=1)
    outputs = controlu2net_forward(params, x, seg)
    outputs = jax.block_until_ready(outputs)

    assert len(outputs) == 7
    for o in outputs:
        assert o.shape == (N, 1, H, W)
        assert bool(jnp.all(jnp.isfinite(o)))
        assert bool(jnp.all((o >= 0.0) & (o <= 1.0)))
    print("KERNEL_OK")
</pallas_src>

<mosaic_0001>
module attributes {stable_mosaic.version = 11 : i64} {
  func.func @_conv_kernel(%arg0: i32, %arg1: i32, %arg2: memref<1x1024x8xbf16, #tpu.memory_space<vmem>>, %arg3: memref<8x8xbf16, #tpu.memory_space<vmem>>, %arg4: memref<1x8xf32, #tpu.memory_space<vmem>>, %arg5: memref<1x8xf32, #tpu.memory_space<vmem>>, %arg6: memref<1x1024x8xbf16, #tpu.memory_space<vmem>>) attributes {dimension_semantics = [#tpu.dimension_semantics<parallel>, #tpu.dimension_semantics<parallel>], iteration_bounds = array<i64: 2, 1>, scalar_prefetch = 0 : i64, scratch_operands = 0 : i64, tpu.core_type = #tpu.core_type<tc>, window_params = [{transform_indices = @transform_0, window_bounds = array<i64: 1, 1024, 8>}, {pipeline_mode = #tpu.pipeline_mode<synchronous>, transform_indices = @transform_1, window_bounds = array<i64: 8, 8>}, {pipeline_mode = #tpu.pipeline_mode<synchronous>, transform_indices = @transform_2, window_bounds = array<i64: 1, 8>}, {pipeline_mode = #tpu.pipeline_mode<synchronous>, transform_indices = @transform_3, window_bounds = array<i64: 1, 8>}, {transform_indices = @transform_4, window_bounds = array<i64: 1, 1024, 8>}]} {
    %c0 = arith.constant 0 : index
    %c0_0 = arith.constant 0 : index
    %c0_1 = arith.constant 0 : index
    %0 = vector.load %arg2[%c0, %c0_0, %c0_1] : memref<1x1024x8xbf16, #tpu.memory_space<vmem>>, vector<1x1024x8xbf16>
    %1 = vector.shape_cast %0 : vector<1x1024x8xbf16> to vector<1024x8xbf16>
    %c0_2 = arith.constant 0 : index
    %c0_3 = arith.constant 0 : index
    %2 = vector.load %arg3[%c0_2, %c0_3] : memref<8x8xbf16, #tpu.memory_space<vmem>>, vector<8x8xbf16>
    %cst = arith.constant dense<0.000000e+00> : vector<1024x8xf32>
    %3 = tpu.matmul %1, %2, %cst {dimension_numbers = #tpu.dot_dimension_numbers<[1], [0], [0], [1], [0, 0, 1, 1], [], []>} : vector<1024x8xbf16>, vector<8x8xbf16>, vector<1024x8xf32> -> vector<1024x8xf32>
    %c0_4 = arith.constant 0 : index
    %c0_5 = arith.constant 0 : index
    %4 = vector.load %arg4[%c0_4, %c0_5] : memref<1x8xf32, #tpu.memory_space<vmem>>, vector<1x8xf32>
    %5 = vector.broadcast %4 : vector<1x8xf32> to vector<1024x8xf32>
    %6 = arith.mulf %3, %5 : vector<1024x8xf32>
    %c0_6 = arith.constant 0 : index
    %c0_7 = arith.constant 0 : index
    %7 = vector.load %arg5[%c0_6, %c0_7] : memref<1x8xf32, #tpu.memory_space<vmem>>, vector<1x8xf32>
    %8 = vector.broadcast %7 : vector<1x8xf32> to vector<1024x8xf32>
    %9 = arith.addf %6, %8 : vector<1024x8xf32>
    %10 = arith.truncf %9 : vector<1024x8xf32> to vector<1024x8xbf16>
    %c0_8 = arith.constant 0 : index
    %c0_9 = arith.constant 0 : index
    %c0_10 = arith.constant 0 : index
    %11 = vector.load %arg6[%c0_8, %c0_9, %c0_10] : memref<1x1024x8xbf16, #tpu.memory_space<vmem>>, vector<1x1024x8xbf16>
    %12 = vector.shape_cast %11 : vector<1x1024x8xbf16> to vector<1024x8xbf16>
    %13 = vector.shape_cast %10 : vector<1024x8xbf16> to vector<1x1024x8xbf16>
    tpu.vector_store %arg6[%c0_8, %c0_9, %c0_10], %13 {strides = array<i32>} : memref<1x1024x8xbf16, #tpu.memory_space<vmem>>, vector<1x1024x8xbf16>,
    return
  }
  func.func @transform_0(%arg0: i32, %arg1: i32) -> (i32, i32, i32) {
    %c0_i32 = arith.constant 0 : i32
    %c0_i32_0 = arith.constant 0 : i32
    return %arg0, %arg1, %c0_i32 : i32, i32, i32
  }
  func.func @transform_1(%arg0: i32, %arg1: i32) -> (i32, i32) {
    %c0_i32 = arith.constant 0 : i32
    %c0_i32_0 = arith.constant 0 : i32
    %c0_i32_1 = arith.constant 0 : i32
    return %c0_i32, %c0_i32_0 : i32, i32
  }
  func.func @transform_2(%arg0: i32, %arg1: i32) -> (i32, i32) {
    %c0_i32 = arith.constant 0 : i32
    %c0_i32_0 = arith.constant 0 : i32
    %c0_i32_1 = arith.constant 0 : i32
    return %c0_i32, %c0_i32_0 : i32, i32
  }
  func.func @transform_3(%arg0: i32, %arg1: i32) -> (i32, i32) {
    %c0_i32 = arith.constant 0 : i32
    %c0_i32_0 = arith.constant 0 : i32
    %c0_i32_1 = arith.constant 0 : i32
    return %c0_i32, %c0_i32_0 : i32, i32
  }
  func.func @transform_4(%arg0: i32, %arg1: i32) -> (i32, i32, i32) {
    %c0_i32 = arith.constant 0 : i32
    %c0_i32_0 = arith.constant 0 : i32
    return %arg0, %arg1, %c0_i32 : i32, i32, i32
  }
}

</mosaic_0001>

<llo_original>
// kernel: _conv2d_pallas.1
$region0: #{_conv2d_pallas.1}
  #allocation0 [shape = 'u32[]', space=smem, size = 0x4, offset = 0x4, fixed_abs, tag = 'smem constant byte address 0x4 - core index']
  #allocation1 [shape = 'u32[144,128]{1,0:T(1,128)}', space=vmem, size = 0x12000, scoped, tag = 'internal scratch']
  %s0 = inlined_call_operand.vmem [shape: bf16[2,1024,8], index: 0, kind: input, shape index: {}]
  %s1 = inlined_call_operand.vmem [shape: bf16[8,8], index: 1, kind: input, shape index: {}]
  %s2 = inlined_call_operand.vmem [shape: f32[1,8], index: 2, kind: input, shape index: {}]
  %s3 = inlined_call_operand.vmem [shape: f32[1,8], index: 3, kind: input, shape index: {}]
  %s4 = inlined_call_operand.vmem [shape: bf16[2,1024,8], index: 4, kind: output, shape index: {}]
  %s5 = sld [smem:[#allocation0]]
  $region49: #{_conv2d_pallas.1} parent=0
    _
  %s7 = ssub.s32 1, %s5
  %s8 = scalar_select 0, %s7, %s5
  loop: start=0, step=1, limit=4
  $region2: #{_conv2d_pallas.1} parent=0 // loop_pre_header
    _
  $region3: #{_conv2d_pallas.1} parent=0 // loop_header
    %s10 = sphi 0, %s14
    %p11 = scmp.ge.s32.totalorder %s10, 4
    %s17 = sphi 0, %s29
    %s18 = sphi 0, %s25
    %s19 = sphi 0, %s17
    %s20 = sphi 0, %s18
    %s21 = sphi 0, %s19
    %s22 = sphi 0, %s20
    %s34 = sphi 0, %s36
    %s37 = sphi 0, %s34
    %s38 = sphi 0, %s37
    %s54 = sphi 0, %s38
    %s58 = sphi 0, %s58
    %s60 = sphi 0, %s58
    %s61 = sphi 0, %s60
    %s75 = sphi 0, %s61
    %s79 = sphi 0, %s79
    %s81 = sphi 0, %s79
    %s82 = sphi 0, %s81
    %s96 = sphi 0, %s82
    %s100 = sphi 0, %s100
    %s102 = sphi 0, %s100
    %s103 = sphi 0, %s102
    %s117 = sphi 0, %s103
    %s125 = sphi 0, %s127
    %s128 = sphi 0, %s125
    %s129 = sphi 0, %s128
    %s145 = sphi 0, %s129
  $region4: #{_conv2d_pallas.1} parent=0 // loop_header_branch
    %13 = sbr.rel (%p11) target = $region8
  $region5: #{_conv2d_pallas.1} parent=0 // loop_body
    %s15 = ssub.s32 %s10, 1
    %s16 = ssub.s32 %s10, 2
    %s23 = sadd.s32 1, %s18
    %p24 = scmp.ge.s32.totalorder %s23, 1
    %s25 = scalar_select %p24, 0, %s23
    %s26 = sadd.s32 1, %s17
    %s27 = scalar_select %p24, %s26, %s17
    %p28 = scmp.ge.s32.totalorder %s27, 2
    %s29 = scalar_select %p28, 0, %s27
    %s30 = ssub.s32 %s17, %s29
    %s31 = ssub.s32 %s18, %s25
    %s32 = sor.u32 %s30, %s31
    %p33 = scmp.eq.s32.totalorder %s32, 0
    %s35 = sadd.s32 %s34, 1
    %s36 = scalar_select %p33, %s34, %s35
    %p39 = pneg %p33
    %p40 = scmp.eq.s32.totalorder %s10, 1
    %p41 = por %p39, %p40
    %p42 = scmp.ne.s32.totalorder %s34, %s37
    %p43 = scmp.eq.s32.totalorder %s10, 0
    %p44 = por %p42, %p43
    %p45 = scmp.ne.s32.totalorder %s34, %s37
    %p46 = scmp.eq.s32.totalorder %s15, 1
    %p47 = por %p45, %p46
    %p48 = scmp.ne.s32.totalorder %s37, %s38
    %p49 = scmp.eq.s32.totalorder %s15, 0
    %p50 = por %p48, %p49
    %p51 = scmp.ne.s32.totalorder %s37, %s38
    %p52 = scmp.eq.s32.totalorder %s16, 1
    %p53 = por %p51, %p52
    %p55 = scmp.ne.s32.totalorder %s38, %s54
    %p56 = scmp.eq.s32.totalorder %s16, 0
    %p57 = por %p55, %p56
    %s59 = sadd.s32 %s58, 1
    %p62 = scmp.eq.s32.totalorder %s10, 1
    %p63 = scmp.ne.s32.totalorder %s58, %s60
    %p64 = scmp.eq.s32.totalorder %s10, 0
    %p65 = por %p63, %p64
    %p66 = scmp.ne.s32.totalorder %s58, %s60
    %p67 = scmp.eq.s32.totalorder %s15, 1
    %p68 = por %p66, %p67
    %p69 = scmp.ne.s32.totalorder %s60, %s61
    %p70 = scmp.eq.s32.totalorder %s15, 0
    %p71 = por %p69, %p70
    %p72 = scmp.ne.s32.totalorder %s60, %s61
    %p73 = scmp.eq.s32.totalorder %s16, 1
    %p74 = por %p72, %p73
    %p76 = scmp.ne.s32.totalorder %s61, %s75
    %p77 = scmp.eq.s32.totalorder %s16, 0
    %p78 = por %p76, %p77
    %s80 = sadd.s32 %s79, 1
    %p83 = scmp.eq.s32.totalorder %s10, 1
    %p84 = scmp.ne.s32.totalorder %s79, %s81
    %p85 = scmp.eq.s32.totalorder %s10, 0
    %p86 = por %p84, %p85
    %p87 = scmp.ne.s32.totalorder %s79, %s81
    %p88 = scmp.eq.s32.totalorder %s15, 1
    %p89 = por %p87, %p88
    %p90 = scmp.ne.s32.totalorder %s81, %s82
    %p91 = scmp.eq.s32.totalorder %s15, 0
    %p92 = por %p90, %p91
    %p93 = scmp.ne.s32.totalorder %s81, %s82
    %p94 = scmp.eq.s32.totalorder %s16, 1
    %p95 = por %p93, %p94
    %p97 = scmp.ne.s32.totalorder %s82, %s96
    %p98 = scmp.eq.s32.totalorder %s16, 0
    %p99 = por %p97, %p98
    %s101 = sadd.s32 %s100, 1
    %p104 = scmp.eq.s32.totalorder %s10, 1
    %p105 = scmp.ne.s32.totalorder %s100, %s102
    %p106 = scmp.eq.s32.totalorder %s10, 0
    %p107 = por %p105, %p106
    %p108 = scmp.ne.s32.totalorder %s100, %s102
    %p109 = scmp.eq.s32.totalorder %s15, 1
    %p110 = por %p108, %p109
    %p111 = scmp.ne.s32.totalorder %s102, %s103
    %p112 = scmp.eq.s32.totalorder %s15, 0
    %p113 = por %p111, %p112
    %p114 = scmp.ne.s32.totalorder %s102, %s103
    %p115 = scmp.eq.s32.totalorder %s16, 1
    %p116 = por %p114, %p115
    %p118 = scmp.ne.s32.totalorder %s103, %s117
    %p119 = scmp.eq.s32.totalorder %s16, 0
    %p120 = por %p118, %p119
    %s121 = ssub.s32 %s17, %s29
    %s122 = ssub.s32 %s18, %s25
    %s123 = sor.u32 %s121, %s122
    %p124 = scmp.eq.s32.totalorder %s123, 0
    %s126 = sadd.s32 %s125, 1
    %s127 = scalar_select %p124, %s125, %s126
    %p130 = pneg %p124
    %p131 = scmp.eq.s32.totalorder %s10, 1
    %p132 = por %p130, %p131
    %p133 = scmp.ne.s32.totalorder %s125, %s128
    %p134 = scmp.eq.s32.totalorder %s10, 0
    %p135 = por %p133, %p134
    %p136 = scmp.ne.s32.totalorder %s125, %s128
    %p137 = scmp.eq.s32.totalorder %s15, 1
    %p138 = por %p136, %p137
    %p139 = scmp.ne.s32.totalorder %s128, %s129
    %p140 = scmp.eq.s32.totalorder %s15, 0
    %p141 = por %p139, %p140
    %p142 = scmp.ne.s32.totalorder %s128, %s129
    %p143 = scmp.eq.s32.totalorder %s16, 1
    %p144 = por %p142, %p143
    %p146 = scmp.ne.s32.totalorder %s129, %s145
    %p147 = scmp.eq.s32.totalorder %s16, 0
    %p148 = por %p146, %p147
    %p149 = scmp.le.s32.totalorder 1, %s10
    %p150 = scmp.lt.s32.totalorder %s10, 3
    %p151 = pnand %p149, %p150
    %p152 = pneg %p151
    // Predicated region
    $region9: #{_conv2d_pallas.1} parent=5 // pred_check
      _
    $region10: #{_conv2d_pallas.1} parent=5 // pred_check_branch
      %154 = sbr.rel (%p151) target = $region12
    $region11: #{_conv2d_pallas.1} parent=5 // pred_region
      %s155 = ssub.s32 %s10, 1
      // Predicated region
      $region13: #{_conv2d_pallas.1} parent=11 // pred_check
        %p156 = pneg %p71
      $region14: #{_conv2d_pallas.1} parent=11 // pred_check_branch
        %158 = sbr.rel (%p156) target = $region16
      $region15: #{_conv2d_pallas.1} parent=11 // pred_region
        _
      $region16: #{_conv2d_pallas.1} parent=11 // pred_fallthru
        _
      // Predicated region
      $region17: #{_conv2d_pallas.1} parent=11 // pred_check
        %p159 = pneg %p92
      $region18: #{_conv2d_pallas.1} parent=11 // pred_check_branch
        %161 = sbr.rel (%p159) target = $region20
      $region19: #{_conv2d_pallas.1} parent=11 // pred_region
        _
      $region20: #{_conv2d_pallas.1} parent=11 // pred_fallthru
        _
      // Predicated region
      $region21: #{_conv2d_pallas.1} parent=11 // pred_check
        %p162 = pneg %p113
      $region22: #{_conv2d_pallas.1} parent=11 // pred_check_branch
        %164 = sbr.rel (%p162) target = $region24
      $region23: #{_conv2d_pallas.1} parent=11 // pred_region
        _
      $region24: #{_conv2d_pallas.1} parent=11 // pred_fallthru
        _
    $region12: #{_conv2d_pallas.1} parent=5 // pred_fallthru
      _
    %p165 = scmp.lt.s32.totalorder %s10, 2
    // Predicated region
    $region25: #{_conv2d_pallas.1} parent=5 // pred_check
      %p166 = pneg %p165
    $region26: #{_conv2d_pallas.1} parent=5 // pred_check_branch
      %168 = sbr.rel (%p166) target = $region28
    $region27: #{_conv2d_pallas.1} parent=5 // pred_region
      // Predicated region
      $region29: #{_conv2d_pallas.1} parent=27 // pred_check
        %p169 = pneg %p44
      $region30: #{_conv2d_pallas.1} parent=27 // pred_check_branch
        %171 = sbr.rel (%p169) target = $region32
      $region31: #{_conv2d_pallas.1} parent=27 // pred_region
        %s172 = smul.u32 128, %s18
        %p173 = scmp.lt.s32.totalorder %s17, 1
        %s174 = scalar_select %p173, %s17, 1
        %p175 = scmp.lt.s32.totalorder %s172, 127
        %s176 = scalar_select %p175, %s172, 127
        %s177 = smul.addr %s174, 128
        %s178 = sadd.s32 %s176, %s177
        %s179 = smul.addr %s178, 4
        %s180 = scalar_lea.vmem %s0, %s179
        %s181 = smul.u32 128, %s18
      $region32: #{_conv2d_pallas.1} parent=27 // pred_fallthru
        _
    $region28: #{_conv2d_pallas.1} parent=5 // pred_fallthru
      _
    %p182 = scmp.le.s32.totalorder 1, %s10
    %p183 = scmp.lt.s32.totalorder %s10, 3
    %p184 = pnand %p182, %p183
    %p185 = pneg %p184
    // Predicated region
    $region33: #{_conv2d_pallas.1} parent=5 // pred_check
      _
    $region34: #{_conv2d_pallas.1} parent=5 // pred_check_branch
      %187 = sbr.rel (%p184) target = $region36
    $region35: #{_conv2d_pallas.1} parent=5 // pred_region
      %s188 = ssub.s32 %s10, 1
      %s189 = smul.u32 128, %s20
      %p190 = scmp.lt.s32.totalorder %s19, 1
      %s191 = scalar_select %p190, %s19, 1
      %p192 = scmp.lt.s32.totalorder %s189, 127
      %s193 = scalar_select %p192, %s189, 127
      %s194 = smul.addr %s191, 128
      %s195 = sadd.s32 %s193, %s194
      %s196 = smul.addr %s195, 4
      %s197 = scalar_lea.vmem %s0, %s196
      %p198 = pneg %p50
      %p199 = pneg %p47
      %p200 = pneg %p71
      %p201 = pneg %p68
      %p202 = pneg %p92
      %p203 = pneg %p89
      %p204 = pneg %p113
      %p205 = pneg %p110
      %p206 = pneg %p141
      %p207 = pneg %p138
      %s208 = smul.u32 128, %s20
      %p209 = scmp.lt.s32.totalorder %s19, 1
      %s210 = scalar_select %p209, %s19, 1
      %p211 = scmp.lt.s32.totalorder %s208, 127
      %s212 = scalar_select %p211, %s208, 127
      %s213 = smul.addr %s210, 128
      %s214 = sadd.s32 %s212, %s213
      %s215 = smul.addr %s214, 4
      %s216 = scalar_lea.vmem %s4, %s215
      %s217 = smul.u32 128, %s20
      %p218 = scmp.lt.s32.totalorder %s19, 1
      %s219 = scalar_select %p218, %s19, 1
      %p220 = scmp.lt.s32.totalorder %s217, 127
      %s221 = scalar_select %p220, %s217, 127
      %s222 = smul.addr %s219, 128
      %s223 = sadd.s32 %s221, %s222
      %s224 = smul.addr %s223, 4
      %s225 = scalar_lea.vmem %s0, %s224
      %s226 = smul.u32 128, %s20
      %s227 = smul.u32 128, %s20
      %p228 = scmp.lt.s32.totalorder %s19, 1
      %s229 = scalar_select %p228, %s19, 1
      %p230 = scmp.lt.s32.totalorder %s227, 127
      %s231 = scalar_select %p230, %s227, 127
      %s232 = smul.addr %s229, 128
      %s233 = sadd.s32 %s231, %s232
      %s234 = smul.addr %s233, 4
      %s235 = scalar_lea.vmem %s4, %s234
      %s236 = smul.u32 128, %s20
      %v238 = vld [vmem:[%s225] sm:$0xf]
      %v239 = vld [vmem:[%s225 + $0x4] sm:$0xf]
      %v240 = vld [vmem:[%s225 + $0x8] sm:$0xf]
      %v241 = vld [vmem:[%s225 + $0xc] sm:$0xf]
      %v242 = vld [vmem:[%s225 + $0x10] sm:$0xf]
      %v243 = vld [vmem:[%s225 + $0x14] sm:$0xf]
      %v244 = vld [vmem:[%s225 + $0x18] sm:$0xf]
      %v245 = vld [vmem:[%s225 + $0x1c] sm:$0xf]
      %v246 = vld [vmem:[%s225 + $0x20] sm:$0xf]
      %v247 = vld [vmem:[%s225 + $0x24] sm:$0xf]
      %v248 = vld [vmem:[%s225 + $0x28] sm:$0xf]
      %v249 = vld [vmem:[%s225 + $0x2c] sm:$0xf]
      %v250 = vld [vmem:[%s225 + $0x30] sm:$0xf]
      %v251 = vld [vmem:[%s225 + $0x34] sm:$0xf]
      %v252 = vld [vmem:[%s225 + $0x38] sm:$0xf]
      %v253 = vld [vmem:[%s225 + $0x3c] sm:$0xf]
      %v254 = vld [vmem:[%s225 + $0x40] sm:$0xf]
      %v255 = vld [vmem:[%s225 + $0x44] sm:$0xf]
      %v256 = vld [vmem:[%s225 + $0x48] sm:$0xf]
      %v257 = vld [vmem:[%s225 + $0x4c] sm:$0xf]
      %v258 = vld [vmem:[%s225 + $0x50] sm:$0xf]
      %v259 = vld [vmem:[%s225 + $0x54] sm:$0xf]
      %v260 = vld [vmem:[%s225 + $0x58] sm:$0xf]
      %v261 = vld [vmem:[%s225 + $0x5c] sm:$0xf]
      %v262 = vld [vmem:[%s225 + $0x60] sm:$0xf]
      %v263 = vld [vmem:[%s225 + $0x64] sm:$0xf]
      %v264 = vld [vmem:[%s225 + $0x68] sm:$0xf]
      %v265 = vld [vmem:[%s225 + $0x6c] sm:$0xf]
      %v266 = vld [vmem:[%s225 + $0x70] sm:$0xf]
      %v267 = vld [vmem:[%s225 + $0x74] sm:$0xf]
      %v268 = vld [vmem:[%s225 + $0x78] sm:$0xf]
      %v269 = vld [vmem:[%s225 + $0x7c] sm:$0xf]
      %v270 = vld [vmem:[%s225 + $0x80] sm:$0xf]
      %v271 = vld [vmem:[%s225 + $0x84] sm:$0xf]
      %v272 = vld [vmem:[%s225 + $0x88] sm:$0xf]
      %v273 = vld [vmem:[%s225 + $0x8c] sm:$0xf]
      %v274 = vld [vmem:[%s225 + $0x90] sm:$0xf]
      %v275 = vld [vmem:[%s225 + $0x94] sm:$0xf]
      %v276 = vld [vmem:[%s225 + $0x98] sm:$0xf]
      %v277 = vld [vmem:[%s225 + $0x9c] sm:$0xf]
      %v278 = vld [vmem:[%s225 + $0xa0] sm:$0xf]
      %v279 = vld [vmem:[%s225 + $0xa4] sm:$0xf]
      %v280 = vld [vmem:[%s225 + $0xa8] sm:$0xf]
      %v281 = vld [vmem:[%s225 + $0xac] sm:$0xf]
      %v282 = vld [vmem:[%s225 + $0xb0] sm:$0xf]
      %v283 = vld [vmem:[%s225 + $0xb4] sm:$0xf]
      %v284 = vld [vmem:[%s225 + $0xb8] sm:$0xf]
      %v285 = vld [vmem:[%s225 + $0xbc] sm:$0xf]
      %v286 = vld [vmem:[%s225 + $0xc0] sm:$0xf]
      %v287 = vld [vmem:[%s225 + $0xc4] sm:$0xf]
      %v288 = vld [vmem:[%s225 + $0xc8] sm:$0xf]
      %v289 = vld [vmem:[%s225 + $0xcc] sm:$0xf]
      %v290 = vld [vmem:[%s225 + $0xd0] sm:$0xf]
      %v291 = vld [vmem:[%s225 + $0xd4] sm:$0xf]
      %v292 = vld [vmem:[%s225 + $0xd8] sm:$0xf]
      %v293 = vld [vmem:[%s225 + $0xdc] sm:$0xf]
      %v294 = vld [vmem:[%s225 + $0xe0] sm:$0xf]
      %v295 = vld [vmem:[%s225 + $0xe4] sm:$0xf]
      %v296 = vld [vmem:[%s225 + $0xe8] sm:$0xf]
      %v297 = vld [vmem:[%s225 + $0xec] sm:$0xf]
      %v298 = vld [vmem:[%s225 + $0xf0] sm:$0xf]
      %v299 = vld [vmem:[%s225 + $0xf4] sm:$0xf]
      %v300 = vld [vmem:[%s225 + $0xf8] sm:$0xf]
      %v301 = vld [vmem:[%s225 + $0xfc] sm:$0xf]
      %v302 = vld [vmem:[%s225 + $0x100] sm:$0xf]
      %v303 = vld [vmem:[%s225 + $0x104] sm:$0xf]
      %v304 = vld [vmem:[%s225 + $0x108] sm:$0xf]
      %v305 = vld [vmem:[%s225 + $0x10c] sm:$0xf]
      %v306 = vld [vmem:[%s225 + $0x110] sm:$0xf]
      %v307 = vld [vmem:[%s225 + $0x114] sm:$0xf]
      %v308 = vld [vmem:[%s225 + $0x118] sm:$0xf]
      %v309 = vld [vmem:[%s225 + $0x11c] sm:$0xf]
      %v310 = vld [vmem:[%s225 + $0x120] sm:$0xf]
      %v311 = vld [vmem:[%s225 + $0x124] sm:$0xf]
      %v312 = vld [vmem:[%s225 + $0x128] sm:$0xf]
      %v313 = vld [vmem:[%s225 + $0x12c] sm:$0xf]
      %v314 = vld [vmem:[%s225 + $0x130] sm:$0xf]
      %v315 = vld [vmem:[%s225 + $0x134] sm:$0xf]
      %v316 = vld [vmem:[%s225 + $0x138] sm:$0xf]
      %v317 = vld [vmem:[%s225 + $0x13c] sm:$0xf]
      %v318 = vld [vmem:[%s225 + $0x140] sm:$0xf]
      %v319 = vld [vmem:[%s225 + $0x144] sm:$0xf]
      %v320 = vld [vmem:[%s225 + $0x148] sm:$0xf]
      %v321 = vld [vmem:[%s225 + $0x14c] sm:$0xf]
      %v322 = vld [vmem:[%s225 + $0x150] sm:$0xf]
      %v323 = vld [vmem:[%s225 + $0x154] sm:$0xf]
      %v324 = vld [vmem:[%s225 + $0x158] sm:$0xf]
      %v325 = vld [vmem:[%s225 + $0x15c] sm:$0xf]
      %v326 = vld [vmem:[%s225 + $0x160] sm:$0xf]
      %v327 = vld [vmem:[%s225 + $0x164] sm:$0xf]
      %v328 = vld [vmem:[%s225 + $0x168] sm:$0xf]
      %v329 = vld [vmem:[%s225 + $0x16c] sm:$0xf]
      %v330 = vld [vmem:[%s225 + $0x170] sm:$0xf]
      %v331 = vld [vmem:[%s225 + $0x174] sm:$0xf]
      %v332 = vld [vmem:[%s225 + $0x178] sm:$0xf]
      %v333 = vld [vmem:[%s225 + $0x17c] sm:$0xf]
      %v334 = vld [vmem:[%s225 + $0x180] sm:$0xf]
      %v335 = vld [vmem:[%s225 + $0x184] sm:$0xf]
      %v336 = vld [vmem:[%s225 + $0x188] sm:$0xf]
      %v337 = vld [vmem:[%s225 + $0x18c] sm:$0xf]
      %v338 = vld [vmem:[%s225 + $0x190] sm:$0xf]
      %v339 = vld [vmem:[%s225 + $0x194] sm:$0xf]
      %v340 = vld [vmem:[%s225 + $0x198] sm:$0xf]
      %v341 = vld [vmem:[%s225 + $0x19c] sm:$0xf]
      %v342 = vld [vmem:[%s225 + $0x1a0] sm:$0xf]
      %v343 = vld [vmem:[%s225 + $0x1a4] sm:$0xf]
      %v344 = vld [vmem:[%s225 + $0x1a8] sm:$0xf]
      %v345 = vld [vmem:[%s225 + $0x1ac] sm:$0xf]
      %v346 = vld [vmem:[%s225 + $0x1b0] sm:$0xf]
      %v347 = vld [vmem:[%s225 + $0x1b4] sm:$0xf]
      %v348 = vld [vmem:[%s225 + $0x1b8] sm:$0xf]
      %v349 = vld [vmem:[%s225 + $0x1bc] sm:$0xf]
      %v350 = vld [vmem:[%s225 + $0x1c0] sm:$0xf]
      %v351 = vld [vmem:[%s225 + $0x1c4] sm:$0xf]
      %v352 = vld [vmem:[%s225 + $0x1c8] sm:$0xf]
      %v353 = vld [vmem:[%s225 + $0x1cc] sm:$0xf]
      %v354 = vld [vmem:[%s225 + $0x1d0] sm:$0xf]
      %v355 = vld [vmem:[%s225 + $0x1d4] sm:$0xf]
      %v356 = vld [vmem:[%s225 + $0x1d8] sm:$0xf]
      %v357 = vld [vmem:[%s225 + $0x1dc] sm:$0xf]
      %v358 = vld [vmem:[%s225 + $0x1e0] sm:$0xf]
      %v359 = vld [vmem:[%s225 + $0x1e4] sm:$0xf]
      %v360 = vld [vmem:[%s225 + $0x1e8] sm:$0xf]
      %v361 = vld [vmem:[%s225 + $0x1ec] sm:$0xf]
      %v362 = vld [vmem:[%s225 + $0x1f0] sm:$0xf]
      %v363 = vld [vmem:[%s225 + $0x1f4] sm:$0xf]
      %v364 = vld [vmem:[%s225 + $0x1f8] sm:$0xf]
      %v365 = vld [vmem:[%s225 + $0x1fc] sm:$0xf]
      %v366 = vld [vmem:[%s1] sm:$0xf]
      %v495 = vunpack.c.l.b16 %v238
      %v496 = vunpack.c.l.b16 %v239
      %v497 = vunpack.c.l.b16 %v240
      %v498 = vunpack.c.l.b16 %v241
      %v499 = vunpack.c.l.b16 %v242
      %v500 = vunpack.c.l.b16 %v243
      %v501 = vunpack.c.l.b16 %v244
      %v502 = vunpack.c.l.b16 %v245
      %v503 = vunpack.c.l.b16 %v246
      %v504 = vunpack.c.l.b16 %v247
      %v505 = vunpack.c.l.b16 %v248
      %v506 = vunpack.c.l.b16 %v249
      %v507 = vunpack.c.l.b16 %v250
      %v508 = vunpack.c.l.b16 %v251
      %v509 = vunpack.c.l.b16 %v252
      %v510 = vunpack.c.l.b16 %v253
      %v511 = vunpack.c.l.b16 %v254
      %v512 = vunpack.c.l.b16 %v255
      %v513 = vunpack.c.l.b16 %v256
      %v514 = vunpack.c.l.b16 %v257
      %v515 = vunpack.c.l.b16 %v258
      %v516 = vunpack.c.l.b16 %v259
      %v517 = vunpack.c.l.b16 %v260
      %v518 = vunpack.c.l.b16 %v261
      %v519 = vunpack.c.l.b16 %v262
      %v520 = vunpack.c.l.b16 %v263
      %v521 = vunpack.c.l.b16 %v264
      %v522 = vunpack.c.l.b16 %v265
      %v523 = vunpack.c.l.b16 %v266
      %v524 = vunpack.c.l.b16 %v267
      %v525 = vunpack.c.l.b16 %v268
      %v526 = vunpack.c.l.b16 %v269
      %v527 = vunpack.c.l.b16 %v270
      %v528 = vunpack.c.l.b16 %v271
      %v529 = vunpack.c.l.b16 %v272
      %v530 = vunpack.c.l.b16 %v273
      %v531 = vunpack.c.l.b16 %v274
      %v532 = vunpack.c.l.b16 %v275
      %v533 = vunpack.c.l.b16 %v276
      %v534 = vunpack.c.l.b16 %v277
      %v535 = vunpack.c.l.b16 %v278
      %v536 = vunpack.c.l.b16 %v279
      %v537 = vunpack.c.l.b16 %v280
      %v538 = vunpack.c.l.b16 %v281
      %v539 = vunpack.c.l.b16 %v282
      %v540 = vunpack.c.l.b16 %v283
      %v541 = vunpack.c.l.b16 %v284
      %v542 = vunpack.c.l.b16 %v285
      %v543 = vunpack.c.l.b16 %v286
      %v544 = vunpack.c.l.b16 %v287
      %v545 = vunpack.c.l.b16 %v288
      %v546 = vunpack.c.l.b16 %v289
      %v547 = vunpack.c.l.b16 %v290
      %v548 = vunpack.c.l.b16 %v291
      %v549 = vunpack.c.l.b16 %v292
      %v550 = vunpack.c.l.b16 %v293
      %v551 = vunpack.c.l.b16 %v294
      %v552 = vunpack.c.l.b16 %v295
      %v553 = vunpack.c.l.b16 %v296
      %v554 = vunpack.c.l.b16 %v297
      %v555 = vunpack.c.l.b16 %v298
      %v556 = vunpack.c.l.b16 %v299
      %v557 = vunpack.c.l.b16 %v300
      %v558 = vunpack.c.l.b16 %v301
      %v559 = vunpack.c.l.b16 %v302
      %v560 = vunpack.c.l.b16 %v303
      %v561 = vunpack.c.l.b16 %v304
      %v562 = vunpack.c.l.b16 %v305
      %v563 = vunpack.c.l.b16 %v306
      %v564 = vunpack.c.l.b16 %v307
      %v565 = vunpack.c.l.b16 %v308
      %v566 = vunpack.c.l.b16 %v309
      %v567 = vunpack.c.l.b16 %v310
      %v568 = vunpack.c.l.b16 %v311
      %v569 = vunpack.c.l.b16 %v312
      %v570 = vunpack.c.l.b16 %v313
      %v571 = vunpack.c.l.b16 %v314
      %v572 = vunpack.c.l.b16 %v315
      %v573 = vunpack.c.l.b16 %v316
      %v574 = vunpack.c.l.b16 %v317
      %v575 = vunpack.c.l.b16 %v318
      %v576 = vunpack.c.l.b16 %v319
      %v577 = vunpack.c.l.b16 %v320
      %v578 = vunpack.c.l.b16 %v321
      %v579 = vunpack.c.l.b16 %v322
      %v580 = vunpack.c.l.b16 %v323
      %v581 = vunpack.c.l.b16 %v324
      %v582 = vunpack.c.l.b16 %v325
      %v583 = vunpack.c.l.b16 %v326
      %v584 = vunpack.c.l.b16 %v327
      %v585 = vunpack.c.l.b16 %v328
      %v586 = vunpack.c.l.b16 %v329
      %v587 = vunpack.c.l.b16 %v330
      %v588 = vunpack.c.l.b16 %v331
      %v589 = vunpack.c.l.b16 %v332
      %v590 = vunpack.c.l.b16 %v333
      %v591 = vunpack.c.l.b16 %v334
      %v592 = vunpack.c.l.b16 %v335
      %v593 = vunpack.c.l.b16 %v336
      %v594 = vunpack.c.l.b16 %v337
      %v595 = vunpack.c.l.b16 %v338
      %v596 = vunpack.c.l.b16 %v339
      %v597 = vunpack.c.l.b16 %v340
      %v598 = vunpack.c.l.b16 %v341
      %v599 = vunpack.c.l.b16 %v342
      %v600 = vunpack.c.l.b16 %v343
      %v601 = vunpack.c.l.b16 %v344
      %v602 = vunpack.c.l.b16 %v345
      %v603 = vunpack.c.l.b16 %v346
      %v604 = vunpack.c.l.b16 %v347
      %v605 = vunpack.c.l.b16 %v348
      %v606 = vunpack.c.l.b16 %v349
      %v607 = vunpack.c.l.b16 %v350
      %v608 = vunpack.c.l.b16 %v351
      %v609 = vunpack.c.l.b16 %v352
      %v610 = vunpack.c.l.b16 %v353
      %v611 = vunpack.c.l.b16 %v354
      %v612 = vunpack.c.l.b16 %v355
      %v613 = vunpack.c.l.b16 %v356
      %v614 = vunpack.c.l.b16 %v357
      %v615 = vunpack.c.l.b16 %v358
      %v616 = vunpack.c.l.b16 %v359
      %v617 = vunpack.c.l.b16 %v360
      %v618 = vunpack.c.l.b16 %v361
      %v619 = vunpack.c.l.b16 %v362
      %v620 = vunpack.c.l.b16 %v363
      %v621 = vunpack.c.l.b16 %v364
      %v622 = vunpack.c.l.b16 %v365
      %v623 = vpack.c.b16 %v496, %v495
      %v624 = vpack.c.b16 %v498, %v497
      %v625 = vpack.c.b16 %v500, %v499
      %v626 = vpack.c.b16 %v502, %v501
      %v627 = vpack.c.b16 %v504, %v503
      %v628 = vpack.c.b16 %v506, %v505
      %v629 = vpack.c.b16 %v508, %v507
      %v630 = vpack.c.b16 %v510, %v509
      %v631 = vpack.c.b16 %v512, %v511
      %v632 = vpack.c.b16 %v514, %v513
      %v633 = vpack.c.b16 %v516, %v515
      %v634 = vpack.c.b16 %v518, %v517
      %v635 = vpack.c.b16 %v520, %v519
      %v636 = vpack.c.b16 %v522, %v521
      %v637 = vpack.c.b16 %v524, %v523
      %v638 = vpack.c.b16 %v526, %v525
      %v639 = vpack.c.b16 %v528, %v527
      %v640 = vpack.c.b16 %v530, %v529
      %v641 = vpack.c.b16 %v532, %v531
      %v642 = vpack.c.b16 %v534, %v533
      %v643 = vpack.c.b16 %v536, %v535
      %v644 = vpack.c.b16 %v538, %v537
      %v645 = vpack.c.b16 %v540, %v539
      %v646 = vpack.c.b16 %v542, %v541
      %v647 = vpack.c.b16 %v544, %v543
      %v648 = vpack.c.b16 %v546, %v545
      %v649 = vpack.c.b16 %v548, %v547
      %v650 = vpack.c.b16 %v550, %v549
      %v651 = vpack.c.b16 %v552, %v551
      %v652 = vpack.c.b16 %v554, %v553
      %v653 = vpack.c.b16 %v556, %v555
      %v654 = vpack.c.b16 %v558, %v557
      %v655 = vpack.c.b16 %v560, %v559
      %v656 = vpack.c.b16 %v562, %v561
      %v657 = vpack.c.b16 %v564, %v563
      %v658 = vpack.c.b16 %v566, %v565
      %v659 = vpack.c.b16 %v568, %v567
      %v660 = vpack.c.b16 %v570, %v569
      %v661 = vpack.c.b16 %v572, %v571
      %v662 = vpack.c.b16 %v574, %v573
      %v663 = vpack.c.b16 %v576, %v575
      %v664 = vpack.c.b16 %v578, %v577
      %v665 = vpack.c.b16 %v580, %v579
      %v666 = vpack.c.b16 %v582, %v581
      %v667 = vpack.c.b16 %v584, %v583
      %v668 = vpack.c.b16 %v586, %v585
      %v669 = vpack.c.b16 %v588, %v587
      %v670 = vpack.c.b16 %v590, %v589
      %v671 = vpack.c.b16 %v592, %v591
      %v672 = vpack.c.b16 %v594, %v593
      %v673 = vpack.c.b16 %v596, %v595
      %v674 = vpack.c.b16 %v598, %v597
      %v675 = vpack.c.b16 %v600, %v599
      %v676 = vpack.c.b16 %v602, %v601
      %v677 = vpack.c.b16 %v604, %v603
      %v678 = vpack.c.b16 %v606, %v605
      %v679 = vpack.c.b16 %v608, %v607
      %v680 = vpack.c.b16 %v610, %v609
      %v681 = vpack.c.b16 %v612, %v611
      %v682 = vpack.c.b16 %v614, %v613
      %v683 = vpack.c.b16 %v616, %v615
      %v684 = vpack.c.b16 %v618, %v617
      %v685 = vpack.c.b16 %v620, %v619
      %v686 = vpack.c.b16 %v622, %v621
      %vm687 = vcmask 64512
      %v689 = vsel %vm687, %v623, 0
      %v692 = vsel %vm687, %v624, 0
      %v695 = vsel %vm687, %v625, 0
      %v698 = vsel %vm687, %v626, 0
      %v701 = vsel %vm687, %v627, 0
      %v704 = vsel %vm687, %v628, 0
      %v707 = vsel %vm687, %v629, 0
      %v710 = vsel %vm687, %v630, 0
      %v713 = vsel %vm687, %v631, 0
      %v716 = vsel %vm687, %v632, 0
      %v719 = vsel %vm687, %v633, 0
      %v722 = vsel %vm687, %v634, 0
      %v725 = vsel %vm687, %v635, 0
      %v728 = vsel %vm687, %v636, 0
      %v731 = vsel %vm687, %v637, 0
      %v734 = vsel %vm687, %v638, 0
      %v737 = vsel %vm687, %v639, 0
      %v740 = vsel %vm687, %v640, 0
      %v743 = vsel %vm687, %v641, 0
      %v746 = vsel %vm687, %v642, 0
      %v749 = vsel %vm687, %v643, 0
      %v752 = vsel %vm687, %v644, 0
      %v755 = vsel %vm687, %v645, 0
      %v758 = vsel %vm687, %v646, 0
      %v761 = vsel %vm687, %v647, 0
      %v764 = vsel %vm687, %v648, 0
      %v767 = vsel %vm687, %v649, 0
      %v770 = vsel %vm687, %v650, 0
      %v773 = vsel %vm687, %v651, 0
      %v776 = vsel %vm687, %v652, 0
      %v779 = vsel %vm687, %v653, 0
      %v782 = vsel %vm687, %v654, 0
      %v785 = vsel %vm687, %v655, 0
      %v788 = vsel %vm687, %v656, 0
      %v791 = vsel %vm687, %v657, 0
      %v794 = vsel %vm687, %v658, 0
      %v797 = vsel %vm687, %v659, 0
      %v800 = vsel %vm687, %v660, 0
      %v803 = vsel %vm687, %v661, 0
      %v806 = vsel %vm687, %v662, 0
      %v809 = vsel %vm687, %v663, 0
      %v812 = vsel %vm687, %v664, 0
      %v815 = vsel %vm687, %v665, 0
      %v818 = vsel %vm687, %v666, 0
      %v821 = vsel %vm687, %v667, 0
      %v824 = vsel %vm687, %v668, 0
      %v827 = vsel %vm687, %v669, 0
      %v830 = vsel %vm687, %v670, 0
      %v833 = vsel %vm687, %v671, 0
      %v836 = vsel %vm687, %v672, 0
      %v839 = vsel %vm687, %v673, 0
      %v842 = vsel %vm687, %v674, 0
      %v845 = vsel %vm687, %v675, 0
      %v848 = vsel %vm687, %v676, 0
      %v851 = vsel %vm687, %v677, 0
      %v854 = vsel %vm687, %v678, 0
      %v857 = vsel %vm687, %v679, 0
      %v860 = vsel %vm687, %v680, 0
      %v863 = vsel %vm687, %v681, 0
      %v866 = vsel %vm687, %v682, 0
      %v869 = vsel %vm687, %v683, 0
      %v872 = vsel %vm687, %v684, 0
      %v875 = vsel %vm687, %v685, 0
      %v878 = vsel %vm687, %v686, 0
      %vm880 = vcmask 1043456
      %v882 = vsel %vm880, %v366, 0
      %884 = vmatprep.subr.bf16.mxu0 0
      %885 = vmatpush1.bf16.msra.mxu0 %v882
      %886 = vmatprep.subr.bf16.mxu0 0
      %887 = vmatpush1.bf16.msra.mxu0 0
      %888 = vmatprep.subr.bf16.mxu0 0
      %889 = vmatpush1.bf16.msra.mxu0 0
      %890 = vmatprep.subr.bf16.mxu0 0
      %891 = vmatpush1.bf16.msra.mxu0 0
      %892 = vmatprep.subr.bf16.mxu0 0
      %893 = vmatpush1.bf16.msra.mxu0 0
      %894 = vmatprep.subr.bf16.mxu0 0
      %895 = vmatpush1.bf16.msra.mxu0 0
      %896 = vmatprep.subr.bf16.mxu0 0
      %897 = vmatpush1.bf16.msra.mxu0 0
      %898 = vmatprep.subr.bf16.mxu0 0
      %899 = vmatpush1.bf16.msra.mxu0 0
      %900 = vmatprep.subr.bf16.mxu0 0
      %901 = vmatpush1.bf16.msra.mxu0 0
      %902 = vmatprep.subr.bf16.mxu0 0
      %903 = vmatpush1.bf16.msra.mxu0 0
      %904 = vmatprep.subr.bf16.mxu0 0
      %905 = vmatpush1.bf16.msra.mxu0 0
      %906 = vmatprep.subr.bf16.mxu0 0
      %907 = vmatpush1.bf16.msra.mxu0 0
      %908 = vmatprep.subr.bf16.mxu0 0
      %909 = vmatpush1.bf16.msra.mxu0 0
      %910 = vmatprep.subr.bf16.mxu0 0
      %911 = vmatpush1.bf16.msra.mxu0 0
      %912 = vmatprep.subr.bf16.mxu0 0
      %913 = vmatpush1.bf16.msra.mxu0 0
      %914 = vmatprep.subr.bf16.mxu0 0
      %915 = vmatpush1.bf16.msra.mxu0 0
      %916 = vmatprep.mubr.bf16.mxu0 0
      %917 = vmatmul.mubr.bf16.gmra.mrb[0].mxu0 %v689
      %v918 = vpop.f32.mrb[0].mxu0
      %v919 = vadd.f32 0.0, %v918
      %v920 = vpop.f32.mrb[0].mxu0
      %v921 = vpop.f32.mrb[0].mxu0
      %v922 = vadd.f32 0.0, %v921
      %v923 = vpop.f32.mrb[0].mxu0
      %924 = vmatprep.mubr.bf16.mxu0 0
      %925 = vmatmul.mubr.bf16.gmra.mrb[0].mxu0 %v692
      %v926 = vpop.f32.mrb[0].mxu0
      %v927 = vadd.f32 0.0, %v926
      %v928 = vpop.f32.mrb[0].mxu0
      %v929 = vpop.f32.mrb[0].mxu0
      %v930 = vadd.f32 0.0, %v929
      %v931 = vpop.f32.mrb[0].mxu0
      %932 = vmatprep.mubr.bf16.mxu0 0
      %933 = vmatmul.mubr.bf16.gmra.mrb[0].mxu0 %v695
      %v934 = vpop.f32.mrb[0].mxu0
      %v935 = vadd.f32 0.0, %v934
      %v936 = vpop.f32.mrb[0].mxu0
      %v937 = vpop.f32.mrb[0].mxu0
      %v938 = vadd.f32 0.0, %v937
      %v939 = vpop.f32.mrb[0].mxu0
      %940 = vmatprep.mubr.bf16.mxu0 0
      %941 = vmatmul.mubr.bf16.gmra.mrb[0].mxu0 %v698
      %v942 = vpop.f32.mrb[0].mxu0
      %v943 = vadd.f32 0.0, %v942
      %v944 = vpop.f32.mrb[0].mxu0
      %v945 = vpop.f32.mrb[0].mxu0
      %v946 = vadd.f32 0.0, %v945
      %v947 = vpop.f32.mrb[0].mxu0
      %948 = vmatprep.mubr.bf16.mxu0 0
      %949 = vmatmul.mubr.bf16.gmra.mrb[0].mxu0 %v701
      %v950 = vpop.f32.mrb[0].mxu0
      %v951 = vadd.f32 0.0, %v950
      %v952 = vpop.f32.mrb[0].mxu0
      %v953 = vpop.f32.mrb[0].mxu0
      %v954 = vadd.f32 0.0, %v953
      %v955 = vpop.f32.mrb[0].mxu0
      %956 = vmatprep.mubr.bf16.mxu0 0
      %957 = vmatmul.mubr.bf16.gmra.mrb[0].mxu0 %v704
      %v958 = vpop.f32.mrb[0].mxu0
      %v959 = vadd.f32 0.0, %v958
      %v960 = vpop.f32.mrb[0].mxu0
      %v961 = vpop.f32.mrb[0].mxu0
      %v962 = vadd.f32 0.0, %v961
      %v963 = vpop.f32.mrb[0].mxu0
      %964 = vmatprep.mubr.bf16.mxu0 0
      %965 = vmatmul.mubr.bf16.gmra.mrb[0].mxu0 %v707
      %v966 = vpop.f32.mrb[0].mxu0
      %v967 = vadd.f32 0.0, %v966
      %v968 = vpop.f32.mrb[0].mxu0
      %v969 = vpop.f32.mrb[0].mxu0
      %v970 = vadd.f32 0.0, %v969
      %v971 = vpop.f32.mrb[0].mxu0
      %972 = vmatprep.mubr.bf16.mxu0 0
      %973 = vmatmul.mubr.bf16.gmra.mrb[0].mxu0 %v710
      %v974 = vpop.f32.mrb[0].mxu0
      %v975 = vadd.f32 0.0, %v974
      %v976 = vpop.f32.mrb[0].mxu0
      %v977 = vpop.f32.mrb[0].mxu0
      %v978 = vadd.f32 0.0, %v977
      %v979 = vpop.f32.mrb[0].mxu0
      %980 = vmatprep.mubr.bf16.mxu0 0
      %981 = vmatmul.mubr.bf16.gmra.mrb[0].mxu0 %v713
      %v982 = vpop.f32.mrb[0].mxu0
      %v983 = vadd.f32 0.0, %v982
      %v984 = vpop.f32.mrb[0].mxu0
      %v985 = vpop.f32.mrb[0].mxu0
      %v986 = vadd.f32 0.0, %v985
      %v987 = vpop.f32.mrb[0].mxu0
      %988 = vmatprep.mubr.bf16.mxu0 0
      %989 = vmatmul.mubr.bf16.gmra.mrb[0].mxu0 %v716
      %v990 = vpop.f32.mrb[0].mxu0
      %v991 = vadd.f32 0.0, %v990
      %v992 = vpop.f32.mrb[0].mxu0
      %v993 = vpop.f32.mrb[0].mxu0
      %v994 = vadd.f32 0.0, %v993
      %v995 = vpop.f32.mrb[0].mxu0
      %996 = vmatprep.mubr.bf16.mxu0 0
      %997 = vmatmul.mubr.bf16.gmra.mrb[0].mxu0 %v719
      %v998 = vpop.f32.mrb[0].mxu0
      %v999 = vadd.f32 0.0, %v998
      %v1000 = vpop.f32.mrb[0].mxu0
      %v1001 = vpop.f32.mrb[0].mxu0
      %v1002 = vadd.f32 0.0, %v1001
      %v1003 = vpop.f32.mrb[0].mxu0
      %1004 = vmatprep.mubr.bf16.mxu0 0
      %1005 = vmatmul.mubr.bf16.gmra.mrb[0].mxu0 %v722
      %v1006 = vpop.f32.mrb[0].mxu0
      %v1007 = vadd.f32 0.0, %v1006
      %v1008 = vpop.f32.mrb[0].mxu0
      %v1009 = vpop.f32.mrb[0].mxu0
      %v1010 = vadd.f32 0.0, %v1009
      %v1011 = vpop.f32.mrb[0].mxu0
      %1012 = vmatprep.mubr.bf16.mxu0 0
      %1013 = vmatmul.mubr.bf16.gmra.mrb[0].mxu0 %v725
      %v1014 = vpop.f32.mrb[0].mxu0
      %v1015 = vadd.f32 0.0, %v1014
      %v1016 = vpop.f32.mrb[0].mxu0
      %v1017 = vpop.f32.mrb[0].mxu0
      %v1018 = vadd.f32 0.0, %v1017
      %v1019 = vpop.f32.mrb[0].mxu0
      %1020 = vmatprep.mubr.bf16.mxu0 0
      %1021 = vmatmul.mubr.bf16.gmra.mrb[0].mxu0 %v728
      %v1022 = vpop.f32.mrb[0].mxu0
      %v1023 = vadd.f32 0.0, %v1022
      %v1024 = vpop.f32.mrb[0].mxu0
      %v1025 = vpop.f32.mrb[0].mxu0
      %v1026 = vadd.f32 0.0, %v1025
      %v1027 = vpop.f32.mrb[0].mxu0
      %1028 = vmatprep.mubr.bf16.mxu0 0
      %1029 = vmatmul.mubr.bf16.gmra.mrb[0].mxu0 %v731
      %v1030 = vpop.f32.mrb[0].mxu0
      %v1031 = vadd.f32 0.0, %v1030
      %v1032 = vpop.f32.mrb[0].mxu0
      %v1033 = vpop.f32.mrb[0].mxu0
      %v1034 = vadd.f32 0.0, %v1033
      %v1035 = vpop.f32.mrb[0].mxu0
      %1036 = vmatprep.mubr.bf16.mxu0 0
      %1037 = vmatmul.mubr.bf16.gmra.mrb[0].mxu0 %v734
      %v1038 = vpop.f32.mrb[0].mxu0
      %v1039 = vadd.f32 0.0, %v1038
      %v1040 = vpop.f32.mrb[0].mxu0
      %v1041 = vpop.f32.mrb[0].mxu0
      %v1042 = vadd.f32 0.0, %v1041
      %v1043 = vpop.f32.mrb[0].mxu0
      %1044 = vmatprep.mubr.bf16.mxu0 0
      %1045 = vmatmul.mubr.bf16.gmra.mrb[0].mxu0 %v737
      %v1046 = vpop.f32.mrb[0].mxu0
      %v1047 = vadd.f32 0.0, %v1046
      %v1048 = vpop.f32.mrb[0].mxu0
      %v1049 = vpop.f32.mrb[0].mxu0
      %v1050 = vadd.f32 0.0, %v1049
      %v1051 = vpop.f32.mrb[0].mxu0
      %1052 = vmatprep.mubr.bf16.mxu0 0
      %1053 = vmatmul.mubr.bf16.gmra.mrb[0].mxu0 %v740
      %v1054 = vpop.f32.mrb[0].mxu0
      %v1055 = vadd.f32 0.0, %v1054
      %v1056 = vpop.f32.mrb[0].mxu0
      %v1057 = vpop.f32.mrb[0].mxu0
      %v1058 = vadd.f32 0.0, %v1057
      %v1059 = vpop.f32.mrb[0].mxu0
      %1060 = vmatprep.mubr.bf16.mxu0 0
      %1061 = vmatmul.mubr.bf16.gmra.mrb[0].mxu0 %v743
      %v1062 = vpop.f32.mrb[0].mxu0
      %v1063 = vadd.f32 0.0, %v1062
      %v1064 = vpop.f32.mrb[0].mxu0
      %v1065 = vpop.f32.mrb[0].mxu0
      %v1066 = vadd.f32 0.0, %v1065
      %v1067 = vpop.f32.mrb[0].mxu0
      %1068 = vmatprep.mubr.bf16.mxu0 0
      %1069 = vmatmul.mubr.bf16.gmra.mrb[0].mxu0 %v746
      %v1070 = vpop.f32.mrb[0].mxu0
      %v1071 = vadd.f32 0.0, %v1070
      %v1072 = vpop.f32.mrb[0].mxu0
      %v1073 = vpop.f32.mrb[0].mxu0
      %v1074 = vadd.f32 0.0, %v1073
      %v1075 = vpop.f32.mrb[0].mxu0
      %1076 = vmatprep.mubr.bf16.mxu0 0
      %1077 = vmatmul.mubr.bf16.gmra.mrb[0].mxu0 %v749
      %v1078 = vpop.f32.mrb[0].mxu0
      %v1079 = vadd.f32 0.0, %v1078
      %v1080 = vpop.f32.mrb[0].mxu0
      %v1081 = vpop.f32.mrb[0].mxu0
      %v1082 = vadd.f32 0.0, %v1081
      %v1083 = vpop.f32.mrb[0].mxu0
      %1084 = vmatprep.mubr.bf16.mxu0 0
      %1085 = vmatmul.mubr.bf16.gmra.mrb[0].mxu0 %v752
      %v1086 = vpop.f32.mrb[0].mxu0
      %v1087 = vadd.f32 0.0, %v1086
      %v1088 = vpop.f32.mrb[0].mxu0
      %v1089 = vpop.f32.mrb[0].mxu0
      %v1090 = vadd.f32 0.0, %v1089
      %v1091 = vpop.f32.mrb[0].mxu0
      %1092 = vmatprep.mubr.bf16.mxu0 0
      %1093 = vmatmul.mubr.bf16.gmra.mrb[0].mxu0 %v755
      %v1094 = vpop.f32.mrb[0].mxu0
      %v1095 = vadd.f32 0.0, %v1094
      %v1096 = vpop.f32.mrb[0].mxu0
      %v1097 = vpop.f32.mrb[0].mxu0
      %v1098 = vadd.f32 0.0, %v1097
      %v1099 = vpop.f32.mrb[0].mxu0
      %1100 = vmatprep.mubr.bf16.mxu0 0
      %1101 = vmatmul.mubr.bf16.gmra.mrb[0].mxu0 %v758
      %v1102 = vpop.f32.mrb[0].mxu0
      %v1103 = vadd.f32 0.0, %v1102
      %v1104 = vpop.f32.mrb[0].mxu0
      %v1105 = vpop.f32.mrb[0].mxu0
      %v1106 = vadd.f32 0.0, %v1105
      %v1107 = vpop.f32.mrb[0].mxu0
      %1108 = vmatprep.mubr.bf16.mxu0 0
      %1109 = vmatmul.mubr.bf16.gmra.mrb[0].mxu0 %v761
      %v1110 = vpop.f32.mrb[0].mxu0
      %v1111 = vadd.f32 0.0, %v1110
      %v1112 = vpop.f32.mrb[0].mxu0
      %v1113 = vpop.f32.mrb[0].mxu0
      %v1114 = vadd.f32 0.0, %v1113
      %v1115 = vpop.f32.mrb[0].mxu0
      %1116 = vmatprep.mubr.bf16.mxu0 0
      %1117 = vmatmul.mubr.bf16.gmra.mrb[0].mxu0 %v764
      %v1118 = vpop.f32.mrb[0].mxu0
      %v1119 = vadd.f32 0.0, %v1118
      %v1120 = vpop.f32.mrb[0].mxu0
      %v1121 = vpop.f32.mrb[0].mxu0
      %v1122 = vadd.f32 0.0, %v1121
      %v1123 = vpop.f32.mrb[0].mxu0
      %1124 = vmatprep.mubr.bf16.mxu0 0
      %1125 = vmatmul.mubr.bf16.gmra.mrb[0].mxu0 %v767
      %v1126 = vpop.f32.mrb[0].mxu0
      %v1127 = vadd.f32 0.0, %v1126
      %v1128 = vpop.f32.mrb[0].mxu0
      %v1129 = vpop.f32.mrb[0].mxu0
      %v1130 = vadd.f32 0.0, %v1129
      %v1131 = vpop.f32.mrb[0].mxu0
      %1132 = vmatprep.mubr.bf16.mxu0 0
      %1133 = vmatmul.mubr.bf16.gmra.mrb[0].mxu0 %v770
      %v1134 = vpop.f32.mrb[0].mxu0
      %v1135 = vadd.f32 0.0, %v1134
      %v1136 = vpop.f32.mrb[0].mxu0
      %v1137 = vpop.f32.mrb[0].mxu0
      %v1138 = vadd.f32 0.0, %v1137
      %v1139 = vpop.f32.mrb[0].mxu0
      %1140 = vmatprep.mubr.bf16.mxu0 0
      %1141 = vmatmul.mubr.bf16.gmra.mrb[0].mxu0 %v773
      %v1142 = vpop.f32.mrb[0].mxu0
      %v1143 = vadd.f32 0.0, %v1142
      %v1144 = vpop.f32.mrb[0].mxu0
      %v1145 = vpop.f32.mrb[0].mxu0
      %v1146 = vadd.f32 0.0, %v1145
      %v1147 = vpop.f32.mrb[0].mxu0
      %1148 = vmatprep.mubr.bf16.mxu0 0
      %1149 = vmatmul.mubr.bf16.gmra.mrb[0].mxu0 %v776
      %v1150 = vpop.f32.mrb[0].mxu0
      %v1151 = vadd.f32 0.0, %v1150
      %v1152 = vpop.f32.mrb[0].mxu0
      %v1153 = vpop.f32.mrb[0].mxu0
      %v1154 = vadd.f32 0.0, %v1153
      %v1155 = vpop.f32.mrb[0].mxu0
      %1156 = vmatprep.mubr.bf16.mxu0 0
      %1157 = vmatmul.mubr.bf16.gmra.mrb[0].mxu0 %v779
      %v1158 = vpop.f32.mrb[0].mxu0
      %v1159 = vadd.f32 0.0, %v1158
      %v1160 = vpop.f32.mrb[0].mxu0
      %v1161 = vpop.f32.mrb[0].mxu0
      %v1162 = vadd.f32 0.0, %v1161
      %v1163 = vpop.f32.mrb[0].mxu0
      %1164 = vmatprep.mubr.bf16.mxu0 0
      %1165 = vmatmul.mubr.bf16.gmra.mrb[0].mxu0 %v782
      %v1166 = vpop.f32.mrb[0].mxu0
      %v1167 = vadd.f32 0.0, %v1166
      %v1168 = vpop.f32.mrb[0].mxu0
      %v1169 = vpop.f32.mrb[0].mxu0
      %v1170 = vadd.f32 0.0, %v1169
      %v1171 = vpop.f32.mrb[0].mxu0
      %1172 = vmatprep.mubr.bf16.mxu0 0
      %1173 = vmatmul.mubr.bf16.gmra.mrb[0].mxu0 %v785
      %v1174 = vpop.f32.mrb[0].mxu0
      %v1175 = vadd.f32 0.0, %v1174
      %v1176 = vpop.f32.mrb[0].mxu0
      %v1177 = vpop.f32.mrb[0].mxu0
      %v1178 = vadd.f32 0.0, %v1177
      %v1179 = vpop.f32.mrb[0].mxu0
      %1180 = vmatprep.mubr.bf16.mxu0 0
      %1181 = vmatmul.mubr.bf16.gmra.mrb[0].mxu0 %v788
      %v1182 = vpop.f32.mrb[0].mxu0
      %v1183 = vadd.f32 0.0, %v1182
      %v1184 = vpop.f32.mrb[0].mxu0
      %v1185 = vpop.f32.mrb[0].mxu0
      %v1186 = vadd.f32 0.0, %v1185
      %v1187 = vpop.f32.mrb[0].mxu0
      %1188 = vmatprep.mubr.bf16.mxu0 0
      %1189 = vmatmul.mubr.bf16.gmra.mrb[0].mxu0 %v791
      %v1190 = vpop.f32.mrb[0].mxu0
      %v1191 = vadd.f32 0.0, %v1190
      %v1192 = vpop.f32.mrb[0].mxu0
      %v1193 = vpop.f32.mrb[0].mxu0
      %v1194 = vadd.f32 0.0, %v1193
      %v1195 = vpop.f32.mrb[0].mxu0
      %1196 = vmatprep.mubr.bf16.mxu0 0
      %1197 = vmatmul.mubr.bf16.gmra.mrb[0].mxu0 %v794
      %v1198 = vpop.f32.mrb[0].mxu0
      %v1199 = vadd.f32 0.0, %v1198
      %v1200 = vpop.f32.mrb[0].mxu0
      %v1201 = vpop.f32.mrb[0].mxu0
      %v1202 = vadd.f32 0.0, %v1201
      %v1203 = vpop.f32.mrb[0].mxu0
      %1204 = vmatprep.mubr.bf16.mxu0 0
      %1205 = vmatmul.mubr.bf16.gmra.mrb[0].mxu0 %v797
      %v1206 = vpop.f32.mrb[0].mxu0
      %v1207 = vadd.f32 0.0, %v1206
      %v1208 = vpop.f32.mrb[0].mxu0
      %v1209 = vpop.f32.mrb[0].mxu0
      %v1210 = vadd.f32 0.0, %v1209
      %v1211 = vpop.f32.mrb[0].mxu0
      %1212 = vmatprep.mubr.bf16.mxu0 0
      %1213 = vmatmul.mubr.bf16.gmra.mrb[0].mxu0 %v800
      %v1214 = vpop.f32.mrb[0].mxu0
      %v1215 = vadd.f32 0.0, %v1214
      %v1216 = vpop.f32.mrb[0].mxu0
      %v1217 = vpop.f32.mrb[0].mxu0
      %v1218 = vadd.f32 0.0, %v1217
      %v1219 = vpop.f32.mrb[0].mxu0
      %1220 = vmatprep.mubr.bf16.mxu0 0
      %1221 = vmatmul.mubr.bf16.gmra.mrb[0].mxu0 %v803
      %v1222 = vpop.f32.mrb[0].mxu0
      %v1223 = vadd.f32 0.0, %v1222
      %v1224 = vpop.f32.mrb[0].mxu0
      %v1225 = vpop.f32.mrb[0].mxu0
      %v1226 = vadd.f32 0.0, %v1225
      %v1227 = vpop.f32.mrb[0].mxu0
      %1228 = vmatprep.mubr.bf16.mxu0 0
      %1229 = vmatmul.mubr.bf16.gmra.mrb[0].mxu0 %v806
      %v1230 = vpop.f32.mrb[0].mxu0
      %v1231 = vadd.f32 0.0, %v1230
      %v1232 = vpop.f32.mrb[0].mxu0
      %v1233 = vpop.f32.mrb[0].mxu0
      %v1234 = vadd.f32 0.0, %v1233
      %v1235 = vpop.f32.mrb[0].mxu0
      %1236 = vmatprep.mubr.bf16.mxu0 0
      %1237 = vmatmul.mubr.bf16.gmra.mrb[0].mxu0 %v809
      %v1238 = vpop.f32.mrb[0].mxu0
      %v1239 = vadd.f32 0.0, %v1238
      %v1240 = vpop.f32.mrb[0].mxu0
      %v1241 = vpop.f32.mrb[0].mxu0
      %v1242 = vadd.f32 0.0, %v1241
      %v1243 = vpop.f32.mrb[0].mxu0
      %1244 = vmatprep.mubr.bf16.mxu0 0
      %1245 = vmatmul.mubr.bf16.gmra.mrb[0].mxu0 %v812
      %v1246 = vpop.f32.mrb[0].mxu0
      %v1247 = vadd.f32 0.0, %v1246
      %v1248 = vpop.f32.mrb[0].mxu0
      %v1249 = vpop.f32.mrb[0].mxu0
      %v1250 = vadd.f32 0.0, %v1249
      %v1251 = vpop.f32.mrb[0].mxu0
      %1252 = vmatprep.mubr.bf16.mxu0 0
      %1253 = vmatmul.mubr.bf16.gmra.mrb[0].mxu0 %v815
      %v1254 = vpop.f32.mrb[0].mxu0
      %v1255 = vadd.f32 0.0, %v1254
      %v1256 = vpop.f32.mrb[0].mxu0
      %v1257 = vpop.f32.mrb[0].mxu0
      %v1258 = vadd.f32 0.0, %v1257
      %v1259 = vpop.f32.mrb[0].mxu0
      %1260 = vmatprep.mubr.bf16.mxu0 0
      %1261 = vmatmul.mubr.bf16.gmra.mrb[0].mxu0 %v818
      %v1262 = vpop.f32.mrb[0].mxu0
      %v1263 = vadd.f32 0.0, %v1262
      %v1264 = vpop.f32.mrb[0].mxu0
      %v1265 = vpop.f32.mrb[0].mxu0
      %v1266 = vadd.f32 0.0, %v1265
      %v1267 = vpop.f32.mrb[0].mxu0
      %1268 = vmatprep.mubr.bf16.mxu0 0
      %1269 = vmatmul.mubr.bf16.gmra.mrb[0].mxu0 %v821
      %v1270 = vpop.f32.mrb[0].mxu0
      %v1271 = vadd.f32 0.0, %v1270
      %v1272 = vpop.f32.mrb[0].mxu0
      %v1273 = vpop.f32.mrb[0].mxu0
      %v1274 = vadd.f32 0.0, %v1273
      %v1275 = vpop.f32.mrb[0].mxu0
      %1276 = vmatprep.mubr.bf16.mxu0 0
      %1277 = vmatmul.mubr.bf16.gmra.mrb[0].mxu0 %v824
      %v1278 = vpop.f32.mrb[0].mxu0
      %v1279 = vadd.f32 0.0, %v1278
      %v1280 = vpop.f32.mrb[0].mxu0
      %v1281 = vpop.f32.mrb[0].mxu0
      %v1282 = vadd.f32 0.0, %v1281
      %v1283 = vpop.f32.mrb[0].mxu0
      %1284 = vmatprep.mubr.bf16.mxu0 0
      %1285 = vmatmul.mubr.bf16.gmra.mrb[0].mxu0 %v827
      %v1286 = vpop.f32.mrb[0].mxu0
      %v1287 = vadd.f32 0.0, %v1286
      %v1288 = vpop.f32.mrb[0].mxu0
      %v1289 = vpop.f32.mrb[0].mxu0
      %v1290 = vadd.f32 0.0, %v1289
      %v1291 = vpop.f32.mrb[0].mxu0
      %1292 = vmatprep.mubr.bf16.mxu0 0
      %1293 = vmatmul.mubr.bf16.gmra.mrb[0].mxu0 %v830
      %v1294 = vpop.f32.mrb[0].mxu0
      %v1295 = vadd.f32 0.0, %v1294
      %v1296 = vpop.f32.mrb[0].mxu0
      %v1297 = vpop.f32.mrb[0].mxu0
      %v1298 = vadd.f32 0.0, %v1297
      %v1299 = vpop.f32.mrb[0].mxu0
      %1300 = vmatprep.mubr.bf16.mxu0 0
      %1301 = vmatmul.mubr.bf16.gmra.mrb[0].mxu0 %v833
      %v1302 = vpop.f32.mrb[0].mxu0
      %v1303 = vadd.f32 0.0, %v1302
      %v1304 = vpop.f32.mrb[0].mxu0
      %v1305 = vpop.f32.mrb[0].mxu0
      %v1306 = vadd.f32 0.0, %v1305
      %v1307 = vpop.f32.mrb[0].mxu0
      %1308 = vmatprep.mubr.bf16.mxu0 0
      %1309 = vmatmul.mubr.bf16.gmra.mrb[0].mxu0 %v836
      %v1310 = vpop.f32.mrb[0].mxu0
      %v1311 = vadd.f32 0.0, %v1310
      %v1312 = vpop.f32.mrb[0].mxu0
      %v1313 = vpop.f32.mrb[0].mxu0
      %v1314 = vadd.f32 0.0, %v1313
      %v1315 = vpop.f32.mrb[0].mxu0
      %1316 = vmatprep.mubr.bf16.mxu0 0
      %1317 = vmatmul.mubr.bf16.gmra.mrb[0].mxu0 %v839
      %v1318 = vpop.f32.mrb[0].mxu0
      %v1319 = vadd.f32 0.0, %v1318
      %v1320 = vpop.f32.mrb[0].mxu0
      %v1321 = vpop.f32.mrb[0].mxu0
      %v1322 = vadd.f32 0.0, %v1321
      %v1323 = vpop.f32.mrb[0].mxu0
      %1324 = vmatprep.mubr.bf16.mxu0 0
      %1325 = vmatmul.mubr.bf16.gmra.mrb[0].mxu0 %v842
      %v1326 = vpop.f32.mrb[0].mxu0
      %v1327 = vadd.f32 0.0, %v1326
      %v1328 = vpop.f32.mrb[0].mxu0
      %v1329 = vpop.f32.mrb[0].mxu0
      %v1330 = vadd.f32 0.0, %v1329
      %v1331 = vpop.f32.mrb[0].mxu0
      %1332 = vmatprep.mubr.bf16.mxu0 0
      %1333 = vmatmul.mubr.bf16.gmra.mrb[0].mxu0 %v845
      %v1334 = vpop.f32.mrb[0].mxu0
      %v1335 = vadd.f32 0.0, %v1334
      %v1336 = vpop.f32.mrb[0].mxu0
      %v1337 = vpop.f32.mrb[0].mxu0
      %v1338 = vadd.f32 0.0, %v1337
      %v1339 = vpop.f32.mrb[0].mxu0
      %1340 = vmatprep.mubr.bf16.mxu0 0
      %1341 = vmatmul.mubr.bf16.gmra.mrb[0].mxu0 %v848
      %v1342 = vpop.f32.mrb[0].mxu0
      %v1343 = vadd.f32 0.0, %v1342
      %v1344 = vpop.f32.mrb[0].mxu0
      %v1345 = vpop.f32.mrb[0].mxu0
      %v1346 = vadd.f32 0.0, %v1345
      %v1347 = vpop.f32.mrb[0].mxu0
      %1348 = vmatprep.mubr.bf16.mxu0 0
      %1349 = vmatmul.mubr.bf16.gmra.mrb[0].mxu0 %v851
      %v1350 = vpop.f32.mrb[0].mxu0
      %v1351 = vadd.f32 0.0, %v1350
      %v1352 = vpop.f32.mrb[0].mxu0
      %v1353 = vpop.f32.mrb[0].mxu0
      %v1354 = vadd.f32 0.0, %v1353
      %v1355 = vpop.f32.mrb[0].mxu0
      %1356 = vmatprep.mubr.bf16.mxu0 0
      %1357 = vmatmul.mubr.bf16.gmra.mrb[0].mxu0 %v854
      %v1358 = vpop.f32.mrb[0].mxu0
      %v1359 = vadd.f32 0.0, %v1358
      %v1360 = vpop.f32.mrb[0].mxu0
      %v1361 = vpop.f32.mrb[0].mxu0
      %v1362 = vadd.f32 0.0, %v1361
      %v1363 = vpop.f32.mrb[0].mxu0
      %1364 = vmatprep.mubr.bf16.mxu0 0
      %1365 = vmatmul.mubr.bf16.gmra.mrb[0].mxu0 %v857
      %v1366 = vpop.f32.mrb[0].mxu0
      %v1367 = vadd.f32 0.0, %v1366
      %v1368 = vpop.f32.mrb[0].mxu0
      %v1369 = vpop.f32.mrb[0].mxu0
      %v1370 = vadd.f32 0.0, %v1369
      %v1371 = vpop.f32.mrb[0].mxu0
      %1372 = vmatprep.mubr.bf16.mxu0 0
      %1373 = vmatmul.mubr.bf16.gmra.mrb[0].mxu0 %v860
      %v1374 = vpop.f32.mrb[0].mxu0
      %v1375 = vadd.f32 0.0, %v1374
      %v1376 = vpop.f32.mrb[0].mxu0
      %v1377 = vpop.f32.mrb[0].mxu0
      %v1378 = vadd.f32 0.0, %v1377
      %v1379 = vpop.f32.mrb[0].mxu0
      %1380 = vmatprep.mubr.bf16.mxu0 0
      %1381 = vmatmul.mubr.bf16.gmra.mrb[0].mxu0 %v863
      %v1382 = vpop.f32.mrb[0].mxu0
      %v1383 = vadd.f32 0.0, %v1382
      %v1384 = vpop.f32.mrb[0].mxu0
      %v1385 = vpop.f32.mrb[0].mxu0
      %v1386 = vadd.f32 0.0, %v1385
      %v1387 = vpop.f32.mrb[0].mxu0
      %1388 = vmatprep.mubr.bf16.mxu0 0
      %1389 = vmatmul.mubr.bf16.gmra.mrb[0].mxu0 %v866
      %v1390 = vpop.f32.mrb[0].mxu0
      %v1391 = vadd.f32 0.0, %v1390
      %v1392 = vpop.f32.mrb[0].mxu0
      %v1393 = vpop.f32.mrb[0].mxu0
      %v1394 = vadd.f32 0.0, %v1393
      %v1395 = vpop.f32.mrb[0].mxu0
      %1396 = vmatprep.mubr.bf16.mxu0 0
      %1397 = vmatmul.mubr.bf16.gmra.mrb[0].mxu0 %v869
      %v1398 = vpop.f32.mrb[0].mxu0
      %v1399 = vadd.f32 0.0, %v1398
      %v1400 = vpop.f32.mrb[0].mxu0
      %v1401 = vpop.f32.mrb[0].mxu0
      %v1402 = vadd.f32 0.0, %v1401
      %v1403 = vpop.f32.mrb[0].mxu0
      %1404 = vmatprep.mubr.bf16.mxu0 0
      %1405 = vmatmul.mubr.bf16.gmra.mrb[0].mxu0 %v872
      %v1406 = vpop.f32.mrb[0].mxu0
      %v1407 = vadd.f32 0.0, %v1406
      %v1408 = vpop.f32.mrb[0].mxu0
      %v1409 = vpop.f32.mrb[0].mxu0
      %v1410 = vadd.f32 0.0, %v1409
      %v1411 = vpop.f32.mrb[0].mxu0
      %1412 = vmatprep.mubr.bf16.mxu0 0
      %1413 = vmatmul.mubr.bf16.gmra.mrb[0].mxu0 %v875
      %v1414 = vpop.f32.mrb[0].mxu0
      %v1415 = vadd.f32 0.0, %v1414
      %v1416 = vpop.f32.mrb[0].mxu0
      %v1417 = vpop.f32.mrb[0].mxu0
      %v1418 = vadd.f32 0.0, %v1417
      %v1419 = vpop.f32.mrb[0].mxu0
      %1420 = vmatprep.mubr.bf16.mxu0 0
      %1421 = vmatmul.mubr.bf16.gmra.mrb[0].mxu0 %v878
      %v1422 = vpop.f32.mrb[0].mxu0
      %v1423 = vadd.f32 0.0, %v1422
      %v1424 = vpop.f32.mrb[0].mxu0
      %v1425 = vpop.f32.mrb[0].mxu0
      %v1426 = vadd.f32 0.0, %v1425
      %v1427 = vpop.f32.mrb[0].mxu0
      %1428 = vdwg.mxu0
      %v1429 = vld [vmem:[%s2] sm:$0x1]
      %v1431 = vlaneseq
      %v1432 = vshrl.u32 %v1431, 7
      %v1433 = vsub.s32 0, %v1432
      %v1434 = vrot.slane %v1429, %v1433
      %v1436 = vmul.f32 %v919, %v1434
      %v1437 = vmul.f32 %v922, %v1434
      %v1438 = vmul.f32 %v927, %v1434
      %v1439 = vmul.f32 %v930, %v1434
      %v1440 = vmul.f32 %v935, %v1434
      %v1441 = vmul.f32 %v938, %v1434
      %v1442 = vmul.f32 %v943, %v1434
      %v1443 = vmul.f32 %v946, %v1434
      %v1444 = vmul.f32 %v951, %v1434
      %v1445 = vmul.f32 %v954, %v1434
      %v1446 = vmul.f32 %v959, %v1434
      %v1447 = vmul.f32 %v962, %v1434
      %v1448 = vmul.f32 %v967, %v1434
      %v1449 = vmul.f32 %v970, %v1434
      %v1450 = vmul.f32 %v975, %v1434
      %v1451 = vmul.f32 %v978, %v1434
      %v1452 = vmul.f32 %v983, %v1434
      %v1453 = vmul.f32 %v986, %v1434
      %v1454 = vmul.f32 %v991, %v1434
      %v1455 = vmul.f32 %v994, %v1434
      %v1456 = vmul.f32 %v999, %v1434
      %v1457 = vmul.f32 %v1002, %v1434
      %v1458 = vmul.f32 %v1007, %v1434
      %v1459 = vmul.f32 %v1010, %v1434
      %v1460 = vmul.f32 %v1015, %v1434
      %v1461 = vmul.f32 %v1018, %v1434
      %v1462 = vmul.f32 %v1023, %v1434
      %v1463 = vmul.f32 %v1026, %v1434
      %v1464 = vmul.f32 %v1031, %v1434
      %v1465 = vmul.f32 %v1034, %v1434
      %v1466 = vmul.f32 %v1039, %v1434
      %v1467 = vmul.f32 %v1042, %v1434
      %v1468 = vmul.f32 %v1047, %v1434
      %v1469 = vmul.f32 %v1050, %v1434
      %v1470 = vmul.f32 %v1055, %v1434
      %v1471 = vmul.f32 %v1058, %v1434
      %v1472 = vmul.f32 %v1063, %v1434
      %v1473 = vmul.f32 %v1066, %v1434
      %v1474 = vmul.f32 %v1071, %v1434
      %v1475 = vmul.f32 %v1074, %v1434
      %v1476 = vmul.f32 %v1079, %v1434
      %v1477 = vmul.f32 %v1082, %v1434
      %v1478 = vmul.f32 %v1087, %v1434
      %v1479 = vmul.f32 %v1090, %v1434
      %v1480 = vmul.f32 %v1095, %v1434
      %v1481 = vmul.f32 %v1098, %v1434
      %v1482 = vmul.f32 %v1103, %v1434
      %v1483 = vmul.f32 %v1106, %v1434
      %v1484 = vmul.f32 %v1111, %v1434
      %v1485 = vmul.f32 %v1114, %v1434
      %v1486 = vmul.f32 %v1119, %v1434
      %v1487 = vmul.f32 %v1122, %v1434
      %v1488 = vmul.f32 %v1127, %v1434
      %v1489 = vmul.f32 %v1130, %v1434
      %v1490 = vmul.f32 %v1135, %v1434
      %v1491 = vmul.f32 %v1138, %v1434
      %v1492 = vmul.f32 %v1143, %v1434
      %v1493 = vmul.f32 %v1146, %v1434
      %v1494 = vmul.f32 %v1151, %v1434
      %v1495 = vmul.f32 %v1154, %v1434
      %v1496 = vmul.f32 %v1159, %v1434
      %v1497 = vmul.f32 %v1162, %v1434
      %v1498 = vmul.f32 %v1167, %v1434
      %v1499 = vmul.f32 %v1170, %v1434
      %v1500 = vmul.f32 %v1175, %v1434
      %v1501 = vmul.f32 %v1178, %v1434
      %v1502 = vmul.f32 %v1183, %v1434
      %v1503 = vmul.f32 %v1186, %v1434
      %v1504 = vmul.f32 %v1191, %v1434
      %v1505 = vmul.f32 %v1194, %v1434
      %v1506 = vmul.f32 %v1199, %v1434
      %v1507 = vmul.f32 %v1202, %v1434
      %v1508 = vmul.f32 %v1207, %v1434
      %v1509 = vmul.f32 %v1210, %v1434
      %v1510 = vmul.f32 %v1215, %v1434
      %v1511 = vmul.f32 %v1218, %v1434
      %v1512 = vmul.f32 %v1223, %v1434
      %v1513 = vmul.f32 %v1226, %v1434
      %v1514 = vmul.f32 %v1231, %v1434
      %v1515 = vmul.f32 %v1234, %v1434
      %v1516 = vmul.f32 %v1239, %v1434
      %v1517 = vmul.f32 %v1242, %v1434
      %v1518 = vmul.f32 %v1247, %v1434
      %v1519 = vmul.f32 %v1250, %v1434
      %v1520 = vmul.f32 %v1255, %v1434
      %v1521 = vmul.f32 %v1258, %v1434
      %v1522 = vmul.f32 %v1263, %v1434
      %v1523 = vmul.f32 %v1266, %v1434
      %v1524 = vmul.f32 %v1271, %v1434
      %v1525 = vmul.f32 %v1274, %v1434
      %v1526 = vmul.f32 %v1279, %v1434
      %v1527 = vmul.f32 %v1282, %v1434
      %v1528 = vmul.f32 %v1287, %v1434
      %v1529 = vmul.f32 %v1290, %v1434
      %v1530 = vmul.f32 %v1295, %v1434
      %v1531 = vmul.f32 %v1298, %v1434
      %v1532 = vmul.f32 %v1303, %v1434
      %v1533 = vmul.f32 %v1306, %v1434
      %v1534 = vmul.f32 %v1311, %v1434
      %v1535 = vmul.f32 %v1314, %v1434
      %v1536 = vmul.f32 %v1319, %v1434
      %v1537 = vmul.f32 %v1322, %v1434
      %v1538 = vmul.f32 %v1327, %v1434
      %v1539 = vmul.f32 %v1330, %v1434
      %v1540 = vmul.f32 %v1335, %v1434
      %v1541 = vmul.f32 %v1338, %v1434
      %v1542 = vmul.f32 %v1343, %v1434
      %v1543 = vmul.f32 %v1346, %v1434
      %v1544 = vmul.f32 %v1351, %v1434
      %v1545 = vmul.f32 %v1354, %v1434
      %v1546 = vmul.f32 %v1359, %v1434
      %v1547 = vmul.f32 %v1362, %v1434
      %v1548 = vmul.f32 %v1367, %v1434
      %v1549 = vmul.f32 %v1370, %v1434
      %v1550 = vmul.f32 %v1375, %v1434
      %v1551 = vmul.f32 %v1378, %v1434
      %v1552 = vmul.f32 %v1383, %v1434
      %v1553 = vmul.f32 %v1386, %v1434
      %v1554 = vmul.f32 %v1391, %v1434
      %v1555 = vmul.f32 %v1394, %v1434
      %v1556 = vmul.f32 %v1399, %v1434
      %v1557 = vmul.f32 %v1402, %v1434
      %v1558 = vmul.f32 %v1407, %v1434
      %v1559 = vmul.f32 %v1410, %v1434
      %v1560 = vmul.f32 %v1415, %v1434
      %v1561 = vmul.f32 %v1418, %v1434
      %v1562 = vmul.f32 %v1423, %v1434
      %v1563 = vmul.f32 %v1426, %v1434
      %v1564 = vld [vmem:[%s3] sm:$0x1]
      %v1566 = vlaneseq
      %v1567 = vshrl.u32 %v1566, 7
      %v1568 = vsub.s32 0, %v1567
      %v1569 = vrot.slane %v1564, %v1568
      %v1571 = vadd.f32 %v1436, %v1569
      %v1572 = vadd.f32 %v1437, %v1569
      %v1573 = vadd.f32 %v1438, %v1569
      %v1574 = vadd.f32 %v1439, %v1569
      %v1575 = vadd.f32 %v1440, %v1569
      %v1576 = vadd.f32 %v1441, %v1569
      %v1577 = vadd.f32 %v1442, %v1569
      %v1578 = vadd.f32 %v1443, %v1569
      %v1579 = vadd.f32 %v1444, %v1569
      %v1580 = vadd.f32 %v1445, %v1569
      %v1581 = vadd.f32 %v1446, %v1569
      %v1582 = vadd.f32 %v1447, %v1569
      %v1583 = vadd.f32 %v1448, %v1569
      %v1584 = vadd.f32 %v1449, %v1569
      %v1585 = vadd.f32 %v1450, %v1569
      %v1586 = vadd.f32 %v1451, %v1569
      %v1587 = vadd.f32 %v1452, %v1569
      %v1588 = vadd.f32 %v1453, %v1569
      %v1589 = vadd.f32 %v1454, %v1569
      %v1590 = vadd.f32 %v1455, %v1569
      %v1591 = vadd.f32 %v1456, %v1569
      %v1592 = vadd.f32 %v1457, %v1569
      %v1593 = vadd.f32 %v1458, %v1569
      %v1594 = vadd.f32 %v1459, %v1569
      %v1595 = vadd.f32 %v1460, %v1569
      %v1596 = vadd.f32 %v1461, %v1569
      %v1597 = vadd.f32 %v1462, %v1569
      %v1598 = vadd.f32 %v1463, %v1569
      %v1599 = vadd.f32 %v1464, %v1569
      %v1600 = vadd.f32 %v1465, %v1569
      %v1601 = vadd.f32 %v1466, %v1569
      %v1602 = vadd.f32 %v1467, %v1569
      %v1603 = vadd.f32 %v1468, %v1569
      %v1604 = vadd.f32 %v1469, %v1569
      %v1605 = vadd.f32 %v1470, %v1569
      %v1606 = vadd.f32 %v1471, %v1569
      %v1607 = vadd.f32 %v1472, %v1569
      %v1608 = vadd.f32 %v1473, %v1569
      %v1609 = vadd.f32 %v1474, %v1569
      %v1610 = vadd.f32 %v1475, %v1569
      %v1611 = vadd.f32 %v1476, %v1569
      %v1612 = vadd.f32 %v1477, %v1569
      %v1613 = vadd.f32 %v1478, %v1569
      %v1614 = vadd.f32 %v1479, %v1569
      %v1615 = vadd.f32 %v1480, %v1569
      %v1616 = vadd.f32 %v1481, %v1569
      %v1617 = vadd.f32 %v1482, %v1569
      %v1618 = vadd.f32 %v1483, %v1569
      %v1619 = vadd.f32 %v1484, %v1569
      %v1620 = vadd.f32 %v1485, %v1569
      %v1621 = vadd.f32 %v1486, %v1569
      %v1622 = vadd.f32 %v1487, %v1569
      %v1623 = vadd.f32 %v1488, %v1569
      %v1624 = vadd.f32 %v1489, %v1569
      %v1625 = vadd.f32 %v1490, %v1569
      %v1626 = vadd.f32 %v1491, %v1569
      %v1627 = vadd.f32 %v1492, %v1569
      %v1628 = vadd.f32 %v1493, %v1569
      %v1629 = vadd.f32 %v1494, %v1569
      %v1630 = vadd.f32 %v1495, %v1569
      %v1631 = vadd.f32 %v1496, %v1569
      %v1632 = vadd.f32 %v1497, %v1569
      %v1633 = vadd.f32 %v1498, %v1569
      %v1634 = vadd.f32 %v1499, %v1569
      %v1635 = vadd.f32 %v1500, %v1569
      %v1636 = vadd.f32 %v1501, %v1569
      %v1637 = vadd.f32 %v1502, %v1569
      %v1638 = vadd.f32 %v1503, %v1569
      %v1639 = vadd.f32 %v1504, %v1569
      %v1640 = vadd.f32 %v1505, %v1569
      %v1641 = vadd.f32 %v1506, %v1569
      %v1642 = vadd.f32 %v1507, %v1569
      %v1643 = vadd.f32 %v1508, %v1569
      %v1644 = vadd.f32 %v1509, %v1569
      %v1645 = vadd.f32 %v1510, %v1569
      %v1646 = vadd.f32 %v1511, %v1569
      %v1647 = vadd.f32 %v1512, %v1569
      %v1648 = vadd.f32 %v1513, %v1569
      %v1649 = vadd.f32 %v1514, %v1569
      %v1650 = vadd.f32 %v1515, %v1569
      %v1651 = vadd.f32 %v1516, %v1569
      %v1652 = vadd.f32 %v1517, %v1569
      %v1653 = vadd.f32 %v1518, %v1569
      %v1654 = vadd.f32 %v1519, %v1569
      %v1655 = vadd.f32 %v1520, %v1569
      %v1656 = vadd.f32 %v1521, %v1569
      %v1657 = vadd.f32 %v1522, %v1569
      %v1658 = vadd.f32 %v1523, %v1569
      %v1659 = vadd.f32 %v1524, %v1569
      %v1660 = vadd.f32 %v1525, %v1569
      %v1661 = vadd.f32 %v1526, %v1569
      %v1662 = vadd.f32 %v1527, %v1569
      %v1663 = vadd.f32 %v1528, %v1569
      %v1664 = vadd.f32 %v1529, %v1569
      %v1665 = vadd.f32 %v1530, %v1569
      %v1666 = vadd.f32 %v1531, %v1569
      %v1667 = vadd.f32 %v1532, %v1569
      %v1668 = vadd.f32 %v1533, %v1569
      %v1669 = vadd.f32 %v1534, %v1569
      %v1670 = vadd.f32 %v1535, %v1569
      %v1671 = vadd.f32 %v1536, %v1569
      %v1672 = vadd.f32 %v1537, %v1569
      %v1673 = vadd.f32 %v1538, %v1569
      %v1674 = vadd.f32 %v1539, %v1569
      %v1675 = vadd.f32 %v1540, %v1569
      %v1676 = vadd.f32 %v1541, %v1569
      %v1677 = vadd.f32 %v1542, %v1569
      %v1678 = vadd.f32 %v1543, %v1569
      %v1679 = vadd.f32 %v1544, %v1569
      %v1680 = vadd.f32 %v1545, %v1569
      %v1681 = vadd.f32 %v1546, %v1569
      %v1682 = vadd.f32 %v1547, %v1569
      %v1683 = vadd.f32 %v1548, %v1569
      %v1684 = vadd.f32 %v1549, %v1569
      %v1685 = vadd.f32 %v1550, %v1569
      %v1686 = vadd.f32 %v1551, %v1569
      %v1687 = vadd.f32 %v1552, %v1569
      %v1688 = vadd.f32 %v1553, %v1569
      %v1689 = vadd.f32 %v1554, %v1569
      %v1690 = vadd.f32 %v1555, %v1569
      %v1691 = vadd.f32 %v1556, %v1569
      %v1692 = vadd.f32 %v1557, %v1569
      %v1693 = vadd.f32 %v1558, %v1569
      %v1694 = vadd.f32 %v1559, %v1569
      %v1695 = vadd.f32 %v1560, %v1569
      %v1696 = vadd.f32 %v1561, %v1569
      %v1697 = vadd.f32 %v1562, %v1569
      %v1698 = vadd.f32 %v1563, %v1569
      %v1699 = vpack.c.bf16 %v1572, %v1571
      %v1700 = vpack.c.bf16 %v1574, %v1573
      %v1701 = vpack.c.bf16 %v1576, %v1575
      %v1702 = vpack.c.bf16 %v1578, %v1577
      %v1703 = vpack.c.bf16 %v1580, %v1579
      %v1704 = vpack.c.bf16 %v1582, %v1581
      %v1705 = vpack.c.bf16 %v1584, %v1583
      %v1706 = vpack.c.bf16 %v1586, %v1585
      %v1707 = vpack.c.bf16 %v1588, %v1587
      %v1708 = vpack.c.bf16 %v1590, %v1589
      %v1709 = vpack.c.bf16 %v1592, %v1591
      %v1710 = vpack.c.bf16 %v1594, %v1593
      %v1711 = vpack.c.bf16 %v1596, %v1595
      %v1712 = vpack.c.bf16 %v1598, %v1597
      %v1713 = vpack.c.bf16 %v1600, %v1599
      %v1714 = vpack.c.bf16 %v1602, %v1601
      %v1715 = vpack.c.bf16 %v1604, %v1603
      %v1716 = vpack.c.bf16 %v1606, %v1605
      %v1717 = vpack.c.bf16 %v1608, %v1607
      %v1718 = vpack.c.bf16 %v1610, %v1609
      %v1719 = vpack.c.bf16 %v1612, %v1611
      %v1720 = vpack.c.bf16 %v1614, %v1613
      %v1721 = vpack.c.bf16 %v1616, %v1615
      %v1722 = vpack.c.bf16 %v1618, %v1617
      %v1723 = vpack.c.bf16 %v1620, %v1619
      %v1724 = vpack.c.bf16 %v1622, %v1621
      %v1725 = vpack.c.bf16 %v1624, %v1623
      %v1726 = vpack.c.bf16 %v1626, %v1625
      %v1727 = vpack.c.bf16 %v1628, %v1627
      %v1728 = vpack.c.bf16 %v1630, %v1629
      %v1729 = vpack.c.bf16 %v1632, %v1631
      %v1730 = vpack.c.bf16 %v1634, %v1633
      %v1731 = vpack.c.bf16 %v1636, %v1635
      %v1732 = vpack.c.bf16 %v1638, %v1637
      %v1733 = vpack.c.bf16 %v1640, %v1639
      %v1734 = vpack.c.bf16 %v1642, %v1641
      %v1735 = vpack.c.bf16 %v1644, %v1643
      %v1736 = vpack.c.bf16 %v1646, %v1645
      %v1737 = vpack.c.bf16 %v1648, %v1647
      %v1738 = vpack.c.bf16 %v1650, %v1649
      %v1739 = vpack.c.bf16 %v1652, %v1651
      %v1740 = vpack.c.bf16 %v1654, %v1653
      %v1741 = vpack.c.bf16 %v1656, %v1655
      %v1742 = vpack.c.bf16 %v1658, %v1657
      %v1743 = vpack.c.bf16 %v1660, %v1659
      %v1744 = vpack.c.bf16 %v1662, %v1661
      %v1745 = vpack.c.bf16 %v1664, %v1663
      %v1746 = vpack.c.bf16 %v1666, %v1665
      %v1747 = vpack.c.bf16 %v1668, %v1667
      %v1748 = vpack.c.bf16 %v1670, %v1669
      %v1749 = vpack.c.bf16 %v1672, %v1671
      %v1750 = vpack.c.bf16 %v1674, %v1673
      %v1751 = vpack.c.bf16 %v1676, %v1675
      %v1752 = vpack.c.bf16 %v1678, %v1677
      %v1753 = vpack.c.bf16 %v1680, %v1679
      %v1754 = vpack.c.bf16 %v1682, %v1681
      %v1755 = vpack.c.bf16 %v1684, %v1683
      %v1756 = vpack.c.bf16 %v1686, %v1685
      %v1757 = vpack.c.bf16 %v1688, %v1687
      %v1758 = vpack.c.bf16 %v1690, %v1689
      %v1759 = vpack.c.bf16 %v1692, %v1691
      %v1760 = vpack.c.bf16 %v1694, %v1693
      %v1761 = vpack.c.bf16 %v1696, %v1695
      %v1762 = vpack.c.bf16 %v1698, %v1697
      %v1827 = vunpack.c.l.b16 %v1699
      %v1828 = vunpack.c.h.b16 %v1699
      %v1829 = vunpack.c.l.b16 %v1700
      %v1830 = vunpack.c.h.b16 %v1700
      %v1831 = vunpack.c.l.b16 %v1701
      %v1832 = vunpack.c.h.b16 %v1701
      %v1833 = vunpack.c.l.b16 %v1702
      %v1834 = vunpack.c.h.b16 %v1702
      %v1835 = vunpack.c.l.b16 %v1703
      %v1836 = vunpack.c.h.b16 %v1703
      %v1837 = vunpack.c.l.b16 %v1704
      %v1838 = vunpack.c.h.b16 %v1704
      %v1839 = vunpack.c.l.b16 %v1705
      %v1840 = vunpack.c.h.b16 %v1705
      %v1841 = vunpack.c.l.b16 %v1706
      %v1842 = vunpack.c.h.b16 %v1706
      %v1843 = vunpack.c.l.b16 %v1707
      %v1844 = vunpack.c.h.b16 %v1707
      %v1845 = vunpack.c.l.b16 %v1708
      %v1846 = vunpack.c.h.b16 %v1708
      %v1847 = vunpack.c.l.b16 %v1709
      %v1848 = vunpack.c.h.b16 %v1709
      %v1849 = vunpack.c.l.b16 %v1710
      %v1850 = vunpack.c.h.b16 %v1710
      %v1851 = vunpack.c.l.b16 %v1711
      %v1852 = vunpack.c.h.b16 %v1711
      %v1853 = vunpack.c.l.b16 %v1712
      %v1854 = vunpack.c.h.b16 %v1712
      %v1855 = vunpack.c.l.b16 %v1713
      %v1856 = vunpack.c.h.b16 %v1713
      %v1857 = vunpack.c.l.b16 %v1714
      %v1858 = vunpack.c.h.b16 %v1714
      %v1859 = vunpack.c.l.b16 %v1715
      %v1860 = vunpack.c.h.b16 %v1715
      %v1861 = vunpack.c.l.b16 %v1716
      %v1862 = vunpack.c.h.b16 %v1716
      %v1863 = vunpack.c.l.b16 %v1717
      %v1864 = vunpack.c.h.b16 %v1717
      %v1865 = vunpack.c.l.b16 %v1718
      %v1866 = vunpack.c.h.b16 %v1718
      %v1867 = vunpack.c.l.b16 %v1719
      %v1868 = vunpack.c.h.b16 %v1719
      %v1869 = vunpack.c.l.b16 %v1720
      %v1870 = vunpack.c.h.b16 %v1720
      %v1871 = vunpack.c.l.b16 %v1721
      %v1872 = vunpack.c.h.b16 %v1721
      %v1873 = vunpack.c.l.b16 %v1722
      %v1874 = vunpack.c.h.b16 %v1722
      %v1875 = vunpack.c.l.b16 %v1723
      %v1876 = vunpack.c.h.b16 %v1723
      %v1877 = vunpack.c.l.b16 %v1724
      %v1878 = vunpack.c.h.b16 %v1724
      %v1879 = vunpack.c.l.b16 %v1725
      %v1880 = vunpack.c.h.b16 %v1725
      %v1881 = vunpack.c.l.b16 %v1726
      %v1882 = vunpack.c.h.b16 %v1726
      %v1883 = vunpack.c.l.b16 %v1727
      %v1884 = vunpack.c.h.b16 %v1727
      %v1885 = vunpack.c.l.b16 %v1728
      %v1886 = vunpack.c.h.b16 %v1728
      %v1887 = vunpack.c.l.b16 %v1729
      %v1888 = vunpack.c.h.b16 %v1729
      %v1889 = vunpack.c.l.b16 %v1730
      %v1890 = vunpack.c.h.b16 %v1730
      %v1891 = vunpack.c.l.b16 %v1731
      %v1892 = vunpack.c.h.b16 %v1731
      %v1893 = vunpack.c.l.b16 %v1732
      %v1894 = vunpack.c.h.b16 %v1732
      %v1895 = vunpack.c.l.b16 %v1733
      %v1896 = vunpack.c.h.b16 %v1733
      %v1897 = vunpack.c.l.b16 %v1734
      %v1898 = vunpack.c.h.b16 %v1734
      %v1899 = vunpack.c.l.b16 %v1735
      %v1900 = vunpack.c.h.b16 %v1735
      %v1901 = vunpack.c.l.b16 %v1736
      %v1902 = vunpack.c.h.b16 %v1736
      %v1903 = vunpack.c.l.b16 %v1737
      %v1904 = vunpack.c.h.b16 %v1737
      %v1905 = vunpack.c.l.b16 %v1738
      %v1906 = vunpack.c.h.b16 %v1738
      %v1907 = vunpack.c.l.b16 %v1739
      %v1908 = vunpack.c.h.b16 %v1739
      %v1909 = vunpack.c.l.b16 %v1740
      %v1910 = vunpack.c.h.b16 %v1740
      %v1911 = vunpack.c.l.b16 %v1741
      %v1912 = vunpack.c.h.b16 %v1741
      %v1913 = vunpack.c.l.b16 %v1742
      %v1914 = vunpack.c.h.b16 %v1742
      %v1915 = vunpack.c.l.b16 %v1743
      %v1916 = vunpack.c.h.b16 %v1743
      %v1917 = vunpack.c.l.b16 %v1744
      %v1918 = vunpack.c.h.b16 %v1744
      %v1919 = vunpack.c.l.b16 %v1745
      %v1920 = vunpack.c.h.b16 %v1745
      %v1921 = vunpack.c.l.b16 %v1746
      %v1922 = vunpack.c.h.b16 %v1746
      %v1923 = vunpack.c.l.b16 %v1747
      %v1924 = vunpack.c.h.b16 %v1747
      %v1925 = vunpack.c.l.b16 %v1748
      %v1926 = vunpack.c.h.b16 %v1748
      %v1927 = vunpack.c.l.b16 %v1749
      %v1928 = vunpack.c.h.b16 %v1749
      %v1929 = vunpack.c.l.b16 %v1750
      %v1930 = vunpack.c.h.b16 %v1750
      %v1931 = vunpack.c.l.b16 %v1751
      %v1932 = vunpack.c.h.b16 %v1751
      %v1933 = vunpack.c.l.b16 %v1752
      %v1934 = vunpack.c.h.b16 %v1752
      %v1935 = vunpack.c.l.b16 %v1753
      %v1936 = vunpack.c.h.b16 %v1753
      %v1937 = vunpack.c.l.b16 %v1754
      %v1938 = vunpack.c.h.b16 %v1754
      %v1939 = vunpack.c.l.b16 %v1755
      %v1940 = vunpack.c.h.b16 %v1755
      %v1941 = vunpack.c.l.b16 %v1756
      %v1942 = vunpack.c.h.b16 %v1756
      %v1943 = vunpack.c.l.b16 %v1757
      %v1944 = vunpack.c.h.b16 %v1757
      %v1945 = vunpack.c.l.b16 %v1758
      %v1946 = vunpack.c.h.b16 %v1758
      %v1947 = vunpack.c.l.b16 %v1759
      %v1948 = vunpack.c.h.b16 %v1759
      %v1949 = vunpack.c.l.b16 %v1760
      %v1950 = vunpack.c.h.b16 %v1760
      %v1951 = vunpack.c.l.b16 %v1761
      %v1952 = vunpack.c.h.b16 %v1761
      %v1953 = vunpack.c.l.b16 %v1762
      %v1954 = vunpack.c.h.b16 %v1762
      %v1955 = vpack.c.b16 %v1827, %v1827
      %v1956 = vpack.c.b16 %v1828, %v1828
      %v1957 = vpack.c.b16 %v1829, %v1829
      %v1958 = vpack.c.b16 %v1830, %v1830
      %v1959 = vpack.c.b16 %v1831, %v1831
      %v1960 = vpack.c.b16 %v1832, %v1832
      %v1961 = vpack.c.b16 %v1833, %v1833
      %v1962 = vpack.c.b16 %v1834, %v1834
      %v1963 = vpack.c.b16 %v1835, %v1835
      %v1964 = vpack.c.b16 %v1836, %v1836
      %v1965 = vpack.c.b16 %v1837, %v1837
      %v1966 = vpack.c.b16 %v1838, %v1838
      %v1967 = vpack.c.b16 %v1839, %v1839
      %v1968 = vpack.c.b16 %v1840, %v1840
      %v1969 = vpack.c.b16 %v1841, %v1841
      %v1970 = vpack.c.b16 %v1842, %v1842
      %v1971 = vpack.c.b16 %v1843, %v1843
      %v1972 = vpack.c.b16 %v1844, %v1844
      %v1973 = vpack.c.b16 %v1845, %v1845
      %v1974 = vpack.c.b16 %v1846, %v1846
      %v1975 = vpack.c.b16 %v1847, %v1847
      %v1976 = vpack.c.b16 %v1848, %v1848
      %v1977 = vpack.c.b16 %v1849, %v1849
      %v1978 = vpack.c.b16 %v1850, %v1850
      %v1979 = vpack.c.b16 %v1851, %v1851
      %v1980 = vpack.c.b16 %v1852, %v1852
      %v1981 = vpack.c.b16 %v1853, %v1853
      %v1982 = vpack.c.b16 %v1854, %v1854
      %v1983 = vpack.c.b16 %v1855, %v1855
      %v1984 = vpack.c.b16 %v1856, %v1856
      %v1985 = vpack.c.b16 %v1857, %v1857
      %v1986 = vpack.c.b16 %v1858, %v1858
      %v1987 = vpack.c.b16 %v1859, %v1859
      %v1988 = vpack.c.b16 %v1860, %v1860
      %v1989 = vpack.c.b16 %v1861, %v1861
      %v1990 = vpack.c.b16 %v1862, %v1862
      %v1991 = vpack.c.b16 %v1863, %v1863
      %v1992 = vpack.c.b16 %v1864, %v1864
      %v1993 = vpack.c.b16 %v1865, %v1865
      %v1994 = vpack.c.b16 %v1866, %v1866
      %v1995 = vpack.c.b16 %v1867, %v1867
      %v1996 = vpack.c.b16 %v1868, %v1868
      %v1997 = vpack.c.b16 %v1869, %v1869
      %v1998 = vpack.c.b16 %v1870, %v1870
      %v1999 = vpack.c.b16 %v1871, %v1871
      %v2000 = vpack.c.b16 %v1872, %v1872
      %v2001 = vpack.c.b16 %v1873, %v1873
      %v2002 = vpack.c.b16 %v1874, %v1874
      %v2003 = vpack.c.b16 %v1875, %v1875
      %v2004 = vpack.c.b16 %v1876, %v1876
      %v2005 = vpack.c.b16 %v1877, %v1877
      %v2006 = vpack.c.b16 %v1878, %v1878
      %v2007 = vpack.c.b16 %v1879, %v1879
      %v2008 = vpack.c.b16 %v1880, %v1880
      %v2009 = vpack.c.b16 %v1881, %v1881
      %v2010 = vpack.c.b16 %v1882, %v1882
      %v2011 = vpack.c.b16 %v1883, %v1883
      %v2012 = vpack.c.b16 %v1884, %v1884
      %v2013 = vpack.c.b16 %v1885, %v1885
      %v2014 = vpack.c.b16 %v1886, %v1886
      %v2015 = vpack.c.b16 %v1887, %v1887
      %v2016 = vpack.c.b16 %v1888, %v1888
      %v2017 = vpack.c.b16 %v1889, %v1889
      %v2018 = vpack.c.b16 %v1890, %v1890
      %v2019 = vpack.c.b16 %v1891, %v1891
      %v2020 = vpack.c.b16 %v1892, %v1892
      %v2021 = vpack.c.b16 %v1893, %v1893
      %v2022 = vpack.c.b16 %v1894, %v1894
      %v2023 = vpack.c.b16 %v1895, %v1895
      %v2024 = vpack.c.b16 %v1896, %v1896
      %v2025 = vpack.c.b16 %v1897, %v1897
      %v2026 = vpack.c.b16 %v1898, %v1898
      %v2027 = vpack.c.b16 %v1899, %v1899
      %v2028 = vpack.c.b16 %v1900, %v1900
      %v2029 = vpack.c.b16 %v1901, %v1901
      %v2030 = vpack.c.b16 %v1902, %v1902
      %v2031 = vpack.c.b16 %v1903, %v1903
      %v2032 = vpack.c.b16 %v1904, %v1904
      %v2033 = vpack.c.b16 %v1905, %v1905
      %v2034 = vpack.c.b16 %v1906, %v1906
      %v2035 = vpack.c.b16 %v1907, %v1907
      %v2036 = vpack.c.b16 %v1908, %v1908
      %v2037 = vpack.c.b16 %v1909, %v1909
      %v2038 = vpack.c.b16 %v1910, %v1910
      %v2039 = vpack.c.b16 %v1911, %v1911
      %v2040 = vpack.c.b16 %v1912, %v1912
      %v2041 = vpack.c.b16 %v1913, %v1913
      %v2042 = vpack.c.b16 %v1914, %v1914
      %v2043 = vpack.c.b16 %v1915, %v1915
      %v2044 = vpack.c.b16 %v1916, %v1916
      %v2045 = vpack.c.b16 %v1917, %v1917
      %v2046 = vpack.c.b16 %v1918, %v1918
      %v2047 = vpack.c.b16 %v1919, %v1919
      %v2048 = vpack.c.b16 %v1920, %v1920
      %v2049 = vpack.c.b16 %v1921, %v1921
      %v2050 = vpack.c.b16 %v1922, %v1922
      %v2051 = vpack.c.b16 %v1923, %v1923
      %v2052 = vpack.c.b16 %v1924, %v1924
      %v2053 = vpack.c.b16 %v1925, %v1925
      %v2054 = vpack.c.b16 %v1926, %v1926
      %v2055 = vpack.c.b16 %v1927, %v1927
      %v2056 = vpack.c.b16 %v1928, %v1928
      %v2057 = vpack.c.b16 %v1929, %v1929
      %v2058 = vpack.c.b16 %v1930, %v1930
      %v2059 = vpack.c.b16 %v1931, %v1931
      %v2060 = vpack.c.b16 %v1932, %v1932
      %v2061 = vpack.c.b16 %v1933, %v1933
      %v2062 = vpack.c.b16 %v1934, %v1934
      %v2063 = vpack.c.b16 %v1935, %v1935
      %v2064 = vpack.c.b16 %v1936, %v1936
      %v2065 = vpack.c.b16 %v1937, %v1937
      %v2066 = vpack.c.b16 %v1938, %v1938
      %v2067 = vpack.c.b16 %v1939, %v1939
      %v2068 = vpack.c.b16 %v1940, %v1940
      %v2069 = vpack.c.b16 %v1941, %v1941
      %v2070 = vpack.c.b16 %v1942, %v1942
      %v2071 = vpack.c.b16 %v1943, %v1943
      %v2072 = vpack.c.b16 %v1944, %v1944
      %v2073 = vpack.c.b16 %v1945, %v1945
      %v2074 = vpack.c.b16 %v1946, %v1946
      %v2075 = vpack.c.b16 %v1947, %v1947
      %v2076 = vpack.c.b16 %v1948, %v1948
      %v2077 = vpack.c.b16 %v1949, %v1949
      %v2078 = vpack.c.b16 %v1950, %v1950
      %v2079 = vpack.c.b16 %v1951, %v1951
      %v2080 = vpack.c.b16 %v1952, %v1952
      %v2081 = vpack.c.b16 %v1953, %v1953
      %v2082 = vpack.c.b16 %v1954, %v1954
      %vm2211 = vcmask 60416
      %2212 = vst.msk [vmem:[%s235] sm:$0xf] %vm2211, %v1955
      %2213 = vst.msk [vmem:[%s235 + $0x4] sm:$0xf] %vm2211, %v1956
      %2214 = vst.msk [vmem:[%s235 + $0x8] sm:$0xf] %vm2211, %v1957
      %2215 = vst.msk [vmem:[%s235 + $0xc] sm:$0xf] %vm2211, %v1958
      %2216 = vst.msk [vmem:[%s235 + $0x10] sm:$0xf] %vm2211, %v1959
      %2217 = vst.msk [vmem:[%s235 + $0x14] sm:$0xf] %vm2211, %v1960
      %2218 = vst.msk [vmem:[%s235 + $0x18] sm:$0xf] %vm2211, %v1961
      %2219 = vst.msk [vmem:[%s235 + $0x1c] sm:$0xf] %vm2211, %v1962
      %2220 = vst.msk [vmem:[%s235 + $0x20] sm:$0xf] %vm2211, %v1963
      %2221 = vst.msk [vmem:[%s235 + $0x24] sm:$0xf] %vm2211, %v1964
      %2222 = vst.msk [vmem:[%s235 + $0x28] sm:$0xf] %vm2211, %v1965
      %2223 = vst.msk [vmem:[%s235 + $0x2c] sm:$0xf] %vm2211, %v1966
      %2224 = vst.msk [vmem:[%s235 + $0x30] sm:$0xf] %vm2211, %v1967
      %2225 = vst.msk [vmem:[%s235 + $0x34] sm:$0xf] %vm2211, %v1968
      %2226 = vst.msk [vmem:[%s235 + $0x38] sm:$0xf] %vm2211, %v1969
      %2227 = vst.msk [vmem:[%s235 + $0x3c] sm:$0xf] %vm2211, %v1970
      %2228 = vst.msk [vmem:[%s235 + $0x40] sm:$0xf] %vm2211, %v1971
      %2229 = vst.msk [vmem:[%s235 + $0x44] sm:$0xf] %vm2211, %v1972
      %2230 = vst.msk [vmem:[%s235 + $0x48] sm:$0xf] %vm2211, %v1973
      %2231 = vst.msk [vmem:[%s235 + $0x4c] sm:$0xf] %vm2211, %v1974
      %2232 = vst.msk [vmem:[%s235 + $0x50] sm:$0xf] %vm2211, %v1975
      %2233 = vst.msk [vmem:[%s235 + $0x54] sm:$0xf] %vm2211, %v1976
      %2234 = vst.msk [vmem:[%s235 + $0x58] sm:$0xf] %vm2211, %v1977
      %2235 = vst.msk [vmem:[%s235 + $0x5c] sm:$0xf] %vm2211, %v1978
      %2236 = vst.msk [vmem:[%s235 + $0x60] sm:$0xf] %vm2211, %v1979
      %2237 = vst.msk [vmem:[%s235 + $0x64] sm:$0xf] %vm2211, %v1980
      %2238 = vst.msk [vmem:[%s235 + $0x68] sm:$0xf] %vm2211, %v1981
      %2239 = vst.msk [vmem:[%s235 + $0x6c] sm:$0xf] %vm2211, %v1982
      %2240 = vst.msk [vmem:[%s235 + $0x70] sm:$0xf] %vm2211, %v1983
      %2241 = vst.msk [vmem:[%s235 + $0x74] sm:$0xf] %vm2211, %v1984
      %2242 = vst.msk [vmem:[%s235 + $0x78] sm:$0xf] %vm2211, %v1985
      %2243 = vst.msk [vmem:[%s235 + $0x7c] sm:$0xf] %vm2211, %v1986
      %2244 = vst.msk [vmem:[%s235 + $0x80] sm:$0xf] %vm2211, %v1987
      %2245 = vst.msk [vmem:[%s235 + $0x84] sm:$0xf] %vm2211, %v1988
      %2246 = vst.msk [vmem:[%s235 + $0x88] sm:$0xf] %vm2211, %v1989
      %2247 = vst.msk [vmem:[%s235 + $0x8c] sm:$0xf] %vm2211, %v1990
      %2248 = vst.msk [vmem:[%s235 + $0x90] sm:$0xf] %vm2211, %v1991
      %2249 = vst.msk [vmem:[%s235 + $0x94] sm:$0xf] %vm2211, %v1992
      %2250 = vst.msk [vmem:[%s235 + $0x98] sm:$0xf] %vm2211, %v1993
      %2251 = vst.msk [vmem:[%s235 + $0x9c] sm:$0xf] %vm2211, %v1994
      %2252 = vst.msk [vmem:[%s235 + $0xa0] sm:$0xf] %vm2211, %v1995
      %2253 = vst.msk [vmem:[%s235 + $0xa4] sm:$0xf] %vm2211, %v1996
      %2254 = vst.msk [vmem:[%s235 + $0xa8] sm:$0xf] %vm2211, %v1997
      %2255 = vst.msk [vmem:[%s235 + $0xac] sm:$0xf] %vm2211, %v1998
      %2256 = vst.msk [vmem:[%s235 + $0xb0] sm:$0xf] %vm2211, %v1999
      %2257 = vst.msk [vmem:[%s235 + $0xb4] sm:$0xf] %vm2211, %v2000
      %2258 = vst.msk [vmem:[%s235 + $0xb8] sm:$0xf] %vm2211, %v2001
      %2259 = vst.msk [vmem:[%s235 + $0xbc] sm:$0xf] %vm2211, %v2002
      %2260 = vst.msk [vmem:[%s235 + $0xc0] sm:$0xf] %vm2211, %v2003
      %2261 = vst.msk [vmem:[%s235 + $0xc4] sm:$0xf] %vm2211, %v2004
      %2262 = vst.msk [vmem:[%s235 + $0xc8] sm:$0xf] %vm2211, %v2005
      %2263 = vst.msk [vmem:[%s235 + $0xcc] sm:$0xf] %vm2211, %v2006
      %2264 = vst.msk [vmem:[%s235 + $0xd0] sm:$0xf] %vm2211, %v2007
      %2265 = vst.msk [vmem:[%s235 + $0xd4] sm:$0xf] %vm2211, %v2008
      %2266 = vst.msk [vmem:[%s235 + $0xd8] sm:$0xf] %vm2211, %v2009
      %2267 = vst.msk [vmem:[%s235 + $0xdc] sm:$0xf] %vm2211, %v2010
      %2268 = vst.msk [vmem:[%s235 + $0xe0] sm:$0xf] %vm2211, %v2011
      %2269 = vst.msk [vmem:[%s235 + $0xe4] sm:$0xf] %vm2211, %v2012
      %2270 = vst.msk [vmem:[%s235 + $0xe8] sm:$0xf] %vm2211, %v2013
      %2271 = vst.msk [vmem:[%s235 + $0xec] sm:$0xf] %vm2211, %v2014
      %2272 = vst.msk [vmem:[%s235 + $0xf0] sm:$0xf] %vm2211, %v2015
      %2273 = vst.msk [vmem:[%s235 + $0xf4] sm:$0xf] %vm2211, %v2016
      %2274 = vst.msk [vmem:[%s235 + $0xf8] sm:$0xf] %vm2211, %v2017
      %2275 = vst.msk [vmem:[%s235 + $0xfc] sm:$0xf] %vm2211, %v2018
      %2276 = vst.msk [vmem:[%s235 + $0x100] sm:$0xf] %vm2211, %v2019
      %2277 = vst.msk [vmem:[%s235 + $0x104] sm:$0xf] %vm2211, %v2020
      %2278 = vst.msk [vmem:[%s235 + $0x108] sm:$0xf] %vm2211, %v2021
      %2279 = vst.msk [vmem:[%s235 + $0x10c] sm:$0xf] %vm2211, %v2022
      %2280 = vst.msk [vmem:[%s235 + $0x110] sm:$0xf] %vm2211, %v2023
      %2281 = vst.msk [vmem:[%s235 + $0x114] sm:$0xf] %vm2211, %v2024
      %2282 = vst.msk [vmem:[%s235 + $0x118] sm:$0xf] %vm2211, %v2025
      %2283 = vst.msk [vmem:[%s235 + $0x11c] sm:$0xf] %vm2211, %v2026
      %2284 = vst.msk [vmem:[%s235 + $0x120] sm:$0xf] %vm2211, %v2027
      %2285 = vst.msk [vmem:[%s235 + $0x124] sm:$0xf] %vm2211, %v2028
      %2286 = vst.msk [vmem:[%s235 + $0x128] sm:$0xf] %vm2211, %v2029
      %2287 = vst.msk [vmem:[%s235 + $0x12c] sm:$0xf] %vm2211, %v2030
      %2288 = vst.msk [vmem:[%s235 + $0x130] sm:$0xf] %vm2211, %v2031
      %2289 = vst.msk [vmem:[%s235 + $0x134] sm:$0xf] %vm2211, %v2032
      %2290 = vst.msk [vmem:[%s235 + $0x138] sm:$0xf] %vm2211, %v2033
      %2291 = vst.msk [vmem:[%s235 + $0x13c] sm:$0xf] %vm2211, %v2034
      %2292 = vst.msk [vmem:[%s235 + $0x140] sm:$0xf] %vm2211, %v2035
      %2293 = vst.msk [vmem:[%s235 + $0x144] sm:$0xf] %vm2211, %v2036
      %2294 = vst.msk [vmem:[%s235 + $0x148] sm:$0xf] %vm2211, %v2037
      %2295 = vst.msk [vmem:[%s235 + $0x14c] sm:$0xf] %vm2211, %v2038
      %2296 = vst.msk [vmem:[%s235 + $0x150] sm:$0xf] %vm2211, %v2039
      %2297 = vst.msk [vmem:[%s235 + $0x154] sm:$0xf] %vm2211, %v2040
      %2298 = vst.msk [vmem:[%s235 + $0x158] sm:$0xf] %vm2211, %v2041
      %2299 = vst.msk [vmem:[%s235 + $0x15c] sm:$0xf] %vm2211, %v2042
      %2300 = vst.msk [vmem:[%s235 + $0x160] sm:$0xf] %vm2211, %v2043
      %2301 = vst.msk [vmem:[%s235 + $0x164] sm:$0xf] %vm2211, %v2044
      %2302 = vst.msk [vmem:[%s235 + $0x168] sm:$0xf] %vm2211, %v2045
      %2303 = vst.msk [vmem:[%s235 + $0x16c] sm:$0xf] %vm2211, %v2046
      %2304 = vst.msk [vmem:[%s235 + $0x170] sm:$0xf] %vm2211, %v2047
      %2305 = vst.msk [vmem:[%s235 + $0x174] sm:$0xf] %vm2211, %v2048
      %2306 = vst.msk [vmem:[%s235 + $0x178] sm:$0xf] %vm2211, %v2049
      %2307 = vst.msk [vmem:[%s235 + $0x17c] sm:$0xf] %vm2211, %v2050
      %2308 = vst.msk [vmem:[%s235 + $0x180] sm:$0xf] %vm2211, %v2051
      %2309 = vst.msk [vmem:[%s235 + $0x184] sm:$0xf] %vm2211, %v2052
      %2310 = vst.msk [vmem:[%s235 + $0x188] sm:$0xf] %vm2211, %v2053
      %2311 = vst.msk [vmem:[%s235 + $0x18c] sm:$0xf] %vm2211, %v2054
      %2312 = vst.msk [vmem:[%s235 + $0x190] sm:$0xf] %vm2211, %v2055
      %2313 = vst.msk [vmem:[%s235 + $0x194] sm:$0xf] %vm2211, %v2056
      %2314 = vst.msk [vmem:[%s235 + $0x198] sm:$0xf] %vm2211, %v2057
      %2315 = vst.msk [vmem:[%s235 + $0x19c] sm:$0xf] %vm2211, %v2058
      %2316 = vst.msk [vmem:[%s235 + $0x1a0] sm:$0xf] %vm2211, %v2059
      %2317 = vst.msk [vmem:[%s235 + $0x1a4] sm:$0xf] %vm2211, %v2060
      %2318 = vst.msk [vmem:[%s235 + $0x1a8] sm:$0xf] %vm2211, %v2061
      %2319 = vst.msk [vmem:[%s235 + $0x1ac] sm:$0xf] %vm2211, %v2062
      %2320 = vst.msk [vmem:[%s235 + $0x1b0] sm:$0xf] %vm2211, %v2063
      %2321 = vst.msk [vmem:[%s235 + $0x1b4] sm:$0xf] %vm2211, %v2064
      %2322 = vst.msk [vmem:[%s235 + $0x1b8] sm:$0xf] %vm2211, %v2065
      %2323 = vst.msk [vmem:[%s235 + $0x1bc] sm:$0xf] %vm2211, %v2066
      %2324 = vst.msk [vmem:[%s235 + $0x1c0] sm:$0xf] %vm2211, %v2067
      %2325 = vst.msk [vmem:[%s235 + $0x1c4] sm:$0xf] %vm2211, %v2068
      %2326 = vst.msk [vmem:[%s235 + $0x1c8] sm:$0xf] %vm2211, %v2069
      %2327 = vst.msk [vmem:[%s235 + $0x1cc] sm:$0xf] %vm2211, %v2070
      %2328 = vst.msk [vmem:[%s235 + $0x1d0] sm:$0xf] %vm2211, %v2071
      %2329 = vst.msk [vmem:[%s235 + $0x1d4] sm:$0xf] %vm2211, %v2072
      %2330 = vst.msk [vmem:[%s235 + $0x1d8] sm:$0xf] %vm2211, %v2073
      %2331 = vst.msk [vmem:[%s235 + $0x1dc] sm:$0xf] %vm2211, %v2074
      %2332 = vst.msk [vmem:[%s235 + $0x1e0] sm:$0xf] %vm2211, %v2075
      %2333 = vst.msk [vmem:[%s235 + $0x1e4] sm:$0xf] %vm2211, %v2076
      %2334 = vst.msk [vmem:[%s235 + $0x1e8] sm:$0xf] %vm2211, %v2077
      %2335 = vst.msk [vmem:[%s235 + $0x1ec] sm:$0xf] %vm2211, %v2078
      %2336 = vst.msk [vmem:[%s235 + $0x1f0] sm:$0xf] %vm2211, %v2079
      %2337 = vst.msk [vmem:[%s235 + $0x1f4] sm:$0xf] %vm2211, %v2080
      %2338 = vst.msk [vmem:[%s235 + $0x1f8] sm:$0xf] %vm2211, %v2081
      %2339 = vst.msk [vmem:[%s235 + $0x1fc] sm:$0xf] %vm2211, %v2082
      %s2340 = smul.u32 128, %s20
      %p2341 = scmp.lt.s32.totalorder %s19, 1
      %s2342 = scalar_select %p2341, %s19, 1
      %p2343 = scmp.lt.s32.totalorder %s2340, 127
      %s2344 = scalar_select %p2343, %s2340, 127
      %s2345 = smul.addr %s2342, 128
      %s2346 = sadd.s32 %s2344, %s2345
      %s2347 = smul.addr %s2346, 4
      %s2348 = scalar_lea.vmem %s4, %s2347
      // Predicated region
      $region37: #{_conv2d_pallas.1} parent=35 // pred_check
        %p2349 = pneg %p138
      $region38: #{_conv2d_pallas.1} parent=35 // pred_check_branch
        %2351 = sbr.rel (%p2349) target = $region40
      $region39: #{_conv2d_pallas.1} parent=35 // pred_region
        %s2352 = smul.u32 128, %s20
      $region40: #{_conv2d_pallas.1} parent=35 // pred_fallthru
        _
    $region36: #{_conv2d_pallas.1} parent=5 // pred_fallthru
      _
    %p2353 = scmp.le.s32.totalorder 2, %s10
    // Predicated region
    $region41: #{_conv2d_pallas.1} parent=5 // pred_check
      %p2354 = pneg %p2353
    $region42: #{_conv2d_pallas.1} parent=5 // pred_check_branch
      %2356 = sbr.rel (%p2354) target = $region44
    $region43: #{_conv2d_pallas.1} parent=5 // pred_region
      %s2357 = ssub.s32 %s10, 2
      // Predicated region
      $region45: #{_conv2d_pallas.1} parent=43 // pred_check
        %p2358 = pneg %p144
      $region46: #{_conv2d_pallas.1} parent=43 // pred_check_branch
        %2360 = sbr.rel (%p2358) target = $region48
      $region47: #{_conv2d_pallas.1} parent=43 // pred_region
        %s2361 = smul.u32 128, %s22
        %p2362 = scmp.lt.s32.totalorder %s21, 1
        %s2363 = scalar_select %p2362, %s21, 1
        %p2364 = scmp.lt.s32.totalorder %s2361, 127
        %s2365 = scalar_select %p2364, %s2361, 127
        %s2366 = smul.addr %s2363, 128
        %s2367 = sadd.s32 %s2365, %s2366
        %s2368 = smul.addr %s2367, 4
        %s2369 = scalar_lea.vmem %s4, %s2368
      $region48: #{_conv2d_pallas.1} parent=43 // pred_fallthru
        _
    $region44: #{_conv2d_pallas.1} parent=5 // pred_fallthru
      _
  $region6: #{_conv2d_pallas.1} parent=0 // loop_footer
    %s14 = sadd.s32 1, %s10
  $region7: #{_conv2d_pallas.1} parent=0 // loop_footer_branch
    %9 = sbr.rel target = $region3
  $region8: #{_conv2d_pallas.1} parent=0 // loop_exit
    _

</llo_original>
